<compile_context>
chip_gen: v7x
topology: tpu7x:2x2x1
jax: 0.10.0
libtpu: 0.0.40
codegen_flags: <defaults>
</compile_context>

<pallas_src>
import functools

import jax
import jax.numpy as jnp
from jax.experimental import pallas as pl
from jax.experimental.pallas import tpu as pltpu


def _round_up(x, m):
    return ((x + m - 1) // m) * m


def _pad2d(x, rows, cols):
    return jnp.pad(x, ((0, rows - x.shape[0]), (0, cols - x.shape[1])))


def _pick_tile(dim, pref):
    """Largest of (pref, 256, 128) that divides `dim` (dim is a mult. of 128)."""
    for t in (pref, 256, 128):
        if t <= dim and dim % t == 0:
            return t
    return dim


def _matmul_bias_act_kernel(a_ref, b_ref, bias_ref, o_ref, acc_ref, *,
                            apply_relu):
    """out[tm, D] = act( sum_k a[tm, tk] @ b[tk, D] + bias[1, D] )."""
    k = pl.program_id(1)

    @pl.when(k == 0)
    def _():
        acc_ref[...] = jnp.zeros_like(acc_ref)

    acc_ref[...] += jnp.dot(a_ref[...], b_ref[...],
                            preferred_element_type=jnp.float32)

    @pl.when(k == pl.num_programs(1) - 1)
    def _():
        out = acc_ref[...] + bias_ref[...]
        if apply_relu:
            out = jnp.maximum(out, 0.0)
        o_ref[...] = out.astype(o_ref.dtype)


def tiled_matmul_bias(a, b, bias=None, *, apply_relu=False,
                      out_dtype=jnp.float32):
    """act(a[M, K] @ b[K, D] + bias[1, D]) with row/reduction tiling.

    M, K, D must be multiples of 128 (caller pads); D stays full-width per
    row tile so the output store is lane-dense.
    """
    m, k_dim = a.shape
    k_dim2, d = b.shape
    assert k_dim == k_dim2 and m % 128 == 0 and k_dim % 128 == 0 and d % 128 == 0
    if bias is None:
        bias = jnp.zeros((1, d), jnp.float32)

    tm = _pick_tile(m, 256)      # row tile (parallel axis)
    tk = _pick_tile(k_dim, 512)  # reduction tile (last, "arbitrary" axis)
    grid = (m // tm, k_dim // tk)

    kernel = functools.partial(_matmul_bias_act_kernel, apply_relu=apply_relu)

    return pl.pallas_call(
        kernel,
        out_shape=jax.ShapeDtypeStruct((m, d), out_dtype),
        grid_spec=pltpu.PrefetchScalarGridSpec(
            num_scalar_prefetch=0,
            grid=grid,
            in_specs=[
                pl.BlockSpec((tm, tk), lambda i, k: (i, k)),
                pl.BlockSpec((tk, d), lambda i, k: (k, 0)),
                pl.BlockSpec((1, d), lambda i, k: (0, 0)),
            ],
            out_specs=pl.BlockSpec((tm, d), lambda i, k: (i, 0)),
            scratch_shapes=[pltpu.VMEM((tm, d), jnp.float32)],
        ),
        compiler_params=pltpu.CompilerParams(
            dimension_semantics=("parallel", "arbitrary"),
            vmem_limit_bytes=32 * 1024 * 1024,
        ),
    )(a, b, bias)


def _gcn_conv(a_hat_p, x_p, w_p, b_p, in_dim, out_dim, *, apply_relu,
              out_dtype):
    """One GCNConv layer on pre-padded bf16 operands.

    Association is chosen so the O(N^2) matmul against A_hat contracts over
    min(in_dim, out_dim) (exact by associativity; bias added at the end).
    """
    if in_dim <= out_dim:
        # aggregate first: (A_hat @ X) @ W + b
        ax = tiled_matmul_bias(a_hat_p, x_p, apply_relu=False,
                               out_dtype=jnp.bfloat16)
        return tiled_matmul_bias(ax, w_p, b_p, apply_relu=apply_relu,
                                 out_dtype=out_dtype)
    # transform first: A_hat @ (X @ W) + b
    xw = tiled_matmul_bias(x_p, w_p, apply_relu=False, out_dtype=jnp.bfloat16)
    return tiled_matmul_bias(a_hat_p, xw, b_p, apply_relu=apply_relu,
                             out_dtype=out_dtype)


def gcn_forward(a_hat, x, w1, b1, w2, b2):
    n, f = x.shape
    hidden = w1.shape[1]
    classes = w2.shape[1]

    n_p = _round_up(n, 128)
    f_p = _round_up(f, 128)
    h_p = _round_up(hidden, 128)
    c_p = _round_up(classes, 128)

    # Normalization of A_hat was computed in f32; cast matmul operands to
    # bf16 for the MXU fast path (f32 accumulation inside the kernels).
    a_p = _pad2d(a_hat, n_p, n_p).astype(jnp.bfloat16)
    x_p = _pad2d(x, n_p, f_p).astype(jnp.bfloat16)
    w1_p = _pad2d(w1, f_p, h_p).astype(jnp.bfloat16)
    w2_p = _pad2d(w2, h_p, c_p).astype(jnp.bfloat16)
    b1_p = _pad2d(b1.reshape(1, -1), 1, h_p).astype(jnp.float32)
    b2_p = _pad2d(b2.reshape(1, -1), 1, c_p).astype(jnp.float32)

    # Layer 1: relu(A_hat @ X @ W1 + b1)
    h = _gcn_conv(a_p, x_p, w1_p, b1_p, f, hidden, apply_relu=True,
                  out_dtype=jnp.bfloat16)
    # Dropout(p=0.5, training=False) -> identity in eval mode.

    # Layer 2: A_hat @ h @ W2 + b2
    out = _gcn_conv(a_p, h, w2_p, b2_p, hidden, classes, apply_relu=False,
                    out_dtype=jnp.float32)
    return out[:n, :classes]


def build_normalized_adjacency(edge_index, num_nodes):
    """Dense symmetric-normalized adjacency with self loops (GCNConv default)."""
    src, dst = edge_index[0], edge_index[1]
    a = jnp.zeros((num_nodes, num_nodes), jnp.float32)
    a = a.at[src, dst].set(1.0)
    a = a.at[dst, src].set(1.0)                       # treat graph as undirected
    a = a + jnp.eye(num_nodes, dtype=jnp.float32)     # self loops
    a = jnp.minimum(a, 1.0)                           # de-duplicate
    deg = jnp.sum(a, axis=1)
    d_inv_sqrt = jnp.where(deg > 0, 1.0 / jnp.sqrt(deg), 0.0)
    return d_inv_sqrt[:, None] * a * d_inv_sqrt[None, :]


def glorot(key, shape):
    fan_in, fan_out = shape
    limit = jnp.sqrt(6.0 / (fan_in + fan_out))
    return jax.random.uniform(key, shape, jnp.float32, -limit, limit)


if __name__ == "__main__":
    key = jax.random.PRNGKey(0)

    # Small synthetic graph: 32 nodes, 16 input features, 32 hidden, 8 classes.
    num_nodes = 32
    num_features = 16
    hidden_channels = 32
    num_classes = 8

    k_x, k_e, k_w1, k_w2 = jax.random.split(key, 4)

    # Node features
    x = jax.random.normal(k_x, (num_nodes, num_features), jnp.float32)

    # Deterministic edge_index [2, E]: ring graph + some random chords
    ring_src = jnp.arange(num_nodes, dtype=jnp.int32)
    ring_dst = (ring_src + 1) % num_nodes
    rand_src = jax.random.randint(k_e, (32,), 0, num_nodes, jnp.int32)
    rand_dst = (rand_src + jax.random.randint(jax.random.fold_in(k_e, 1),
                                              (32,), 1, num_nodes,
                                              jnp.int32)) % num_nodes
    edge_index = jnp.stack([jnp.concatenate([ring_src, rand_src]),
                            jnp.concatenate([ring_dst, rand_dst])])

    # Parameters (deterministic init; GCNConv: W [in, out], bias [out])
    w1 = glorot(k_w1, (num_features, hidden_channels))
    b1 = jnp.zeros((hidden_channels,), jnp.float32)
    w2 = glorot(k_w2, (hidden_channels, num_classes))
    b2 = jnp.zeros((num_classes,), jnp.float32)

    a_hat = build_normalized_adjacency(edge_index, num_nodes)

    out = jax.jit(gcn_forward)(a_hat, x, w1, b1, w2, b2)
    jax.block_until_ready(out)

    # Cross-check against plain-JAX f32 reference of the same math.
    # (Kernel matmul operands are bf16 -> tolerance relaxed accordingly.)
    ref = (a_hat @ jnp.maximum(a_hat @ (x @ w1) + b1[None, :], 0.0) @ w2
           + b2[None, :])
    assert out.shape == (num_nodes, num_classes)
    assert jnp.allclose(out, ref, atol=5e-2, rtol=5e-2), (
        float(jnp.max(jnp.abs(out - ref))))

    print("KERNEL_OK")
</pallas_src>

<mosaic_0001>
module attributes {stable_mosaic.version = 11 : i64} {
  func.func @_matmul_bias_act_kernel(%arg0: i32, %arg1: i32, %arg2: memref<128x128xbf16, #tpu.memory_space<vmem>>, %arg3: memref<128x128xbf16, #tpu.memory_space<vmem>>, %arg4: memref<1x128xf32, #tpu.memory_space<vmem>>, %arg5: memref<128x128xbf16, #tpu.memory_space<vmem>>, %arg6: memref<128x128xf32, #tpu.memory_space<vmem>>) attributes {dimension_semantics = [#tpu.dimension_semantics<parallel>, #tpu.dimension_semantics<arbitrary>], iteration_bounds = array<i64: 1, 1>, scalar_prefetch = 0 : i64, scratch_operands = 1 : i64, tpu.core_type = #tpu.core_type<tc>, window_params = [{transform_indices = @transform_0, window_bounds = array<i64: 128, 128>}, {transform_indices = @transform_1, window_bounds = array<i64: 128, 128>}, {pipeline_mode = #tpu.pipeline_mode<synchronous>, transform_indices = @transform_2, window_bounds = array<i64: 1, 128>}, {transform_indices = @transform_3, window_bounds = array<i64: 128, 128>}]} {
    %c0_i32 = arith.constant 0 : i32
    %0 = arith.cmpi eq, %arg1, %c0_i32 : i32
    %1 = arith.extui %0 : i1 to i32
    %c0_i32_0 = arith.constant 0 : i32
    %2 = arith.cmpi ne, %1, %c0_i32_0 : i32
    scf.if %2 {
      %cst_10 = arith.constant 0.000000e+00 : f32
      %12 = vector.broadcast %cst_10 : f32 to vector<128x128xf32>
      %c0_11 = arith.constant 0 : index
      %c0_12 = arith.constant 0 : index
      %13 = vector.load %arg6[%c0_11, %c0_12] : memref<128x128xf32, #tpu.memory_space<vmem>>, vector<128x128xf32>
      tpu.vector_store %arg6[%c0_11, %c0_12], %12 {strides = array<i32>} : memref<128x128xf32, #tpu.memory_space<vmem>>, vector<128x128xf32>,
    } else {
    }
    %c0 = arith.constant 0 : index
    %c0_1 = arith.constant 0 : index
    %3 = vector.load %arg6[%c0, %c0_1] : memref<128x128xf32, #tpu.memory_space<vmem>>, vector<128x128xf32>
    %c0_2 = arith.constant 0 : index
    %c0_3 = arith.constant 0 : index
    %4 = vector.load %arg2[%c0_2, %c0_3] : memref<128x128xbf16, #tpu.memory_space<vmem>>, vector<128x128xbf16>
    %c0_4 = arith.constant 0 : index
    %c0_5 = arith.constant 0 : index
    %5 = vector.load %arg3[%c0_4, %c0_5] : memref<128x128xbf16, #tpu.memory_space<vmem>>, vector<128x128xbf16>
    %cst = arith.constant dense<0.000000e+00> : vector<128x128xf32>
    %6 = tpu.matmul %4, %5, %cst {dimension_numbers = #tpu.dot_dimension_numbers<[1], [0], [0], [1], [0, 0, 1, 1], [], []>} : vector<128x128xbf16>, vector<128x128xbf16>, vector<128x128xf32> -> vector<128x128xf32>
    %7 = arith.addf %3, %6 : vector<128x128xf32>
    %c0_6 = arith.constant 0 : index
    %c0_7 = arith.constant 0 : index
    %8 = vector.load %arg6[%c0_6, %c0_7] : memref<128x128xf32, #tpu.memory_space<vmem>>, vector<128x128xf32>
    tpu.vector_store %arg6[%c0_6, %c0_7], %7 {strides = array<i32>} : memref<128x128xf32, #tpu.memory_space<vmem>>, vector<128x128xf32>,
    %c0_i32_8 = arith.constant 0 : i32
    %9 = arith.cmpi eq, %arg1, %c0_i32_8 : i32
    %10 = arith.extui %9 : i1 to i32
    %c0_i32_9 = arith.constant 0 : i32
    %11 = arith.cmpi ne, %10, %c0_i32_9 : i32
    scf.if %11 {
      %c0_10 = arith.constant 0 : index
      %c0_11 = arith.constant 0 : index
      %12 = vector.load %arg6[%c0_10, %c0_11] : memref<128x128xf32, #tpu.memory_space<vmem>>, vector<128x128xf32>
      %c0_12 = arith.constant 0 : index
      %c0_13 = arith.constant 0 : index
      %13 = vector.load %arg4[%c0_12, %c0_13] : memref<1x128xf32, #tpu.memory_space<vmem>>, vector<1x128xf32>
      %14 = vector.broadcast %13 : vector<1x128xf32> to vector<128x128xf32>
      %15 = arith.addf %12, %14 : vector<128x128xf32>
      %16 = arith.truncf %15 : vector<128x128xf32> to vector<128x128xbf16>
      %c0_14 = arith.constant 0 : index
      %c0_15 = arith.constant 0 : index
      %17 = vector.load %arg5[%c0_14, %c0_15] : memref<128x128xbf16, #tpu.memory_space<vmem>>, vector<128x128xbf16>
      tpu.vector_store %arg5[%c0_14, %c0_15], %16 {strides = array<i32>} : memref<128x128xbf16, #tpu.memory_space<vmem>>, vector<128x128xbf16>,
    } else {
    }
    return
  }
  func.func @transform_0(%arg0: i32, %arg1: i32) -> (i32, i32) {
    %c0_i32 = arith.constant 0 : i32
    return %arg0, %arg1 : i32, i32
  }
  func.func @transform_1(%arg0: i32, %arg1: i32) -> (i32, i32) {
    %c0_i32 = arith.constant 0 : i32
    %c0_i32_0 = arith.constant 0 : i32
    return %arg1, %c0_i32 : i32, i32
  }
  func.func @transform_2(%arg0: i32, %arg1: i32) -> (i32, i32) {
    %c0_i32 = arith.constant 0 : i32
    %c0_i32_0 = arith.constant 0 : i32
    %c0_i32_1 = arith.constant 0 : i32
    return %c0_i32, %c0_i32_0 : i32, i32
  }
  func.func @transform_3(%arg0: i32, %arg1: i32) -> (i32, i32) {
    %c0_i32 = arith.constant 0 : i32
    %c0_i32_0 = arith.constant 0 : i32
    return %arg0, %c0_i32 : i32, i32
  }
}

module attributes {stable_mosaic.version = 11 : i64} {
  func.func @_matmul_bias_act_kernel(%arg0: i32, %arg1: i32, %arg2: memref<128x128xbf16, #tpu.memory_space<vmem>>, %arg3: memref<128x128xbf16, #tpu.memory_space<vmem>>, %arg4: memref<1x128xf32, #tpu.memory_space<vmem>>, %arg5: memref<128x128xbf16, #tpu.memory_space<vmem>>, %arg6: memref<128x128xf32, #tpu.memory_space<vmem>>) attributes {dimension_semantics = [#tpu.dimension_semantics<parallel>, #tpu.dimension_semantics<arbitrary>], iteration_bounds = array<i64: 1, 1>, scalar_prefetch = 0 : i64, scratch_operands = 1 : i64, tpu.core_type = #tpu.core_type<tc>, window_params = [{transform_indices = @transform_0, window_bounds = array<i64: 128, 128>}, {transform_indices = @transform_1, window_bounds = array<i64: 128, 128>}, {pipeline_mode = #tpu.pipeline_mode<synchronous>, transform_indices = @transform_2, window_bounds = array<i64: 1, 128>}, {transform_indices = @transform_3, window_bounds = array<i64: 128, 128>}]} {
    %c0_i32 = arith.constant 0 : i32
    %0 = arith.cmpi eq, %arg1, %c0_i32 : i32
    %1 = arith.extui %0 : i1 to i32
    %c0_i32_0 = arith.constant 0 : i32
    %2 = arith.cmpi ne, %1, %c0_i32_0 : i32
    scf.if %2 {
      %cst_10 = arith.constant 0.000000e+00 : f32
      %12 = vector.broadcast %cst_10 : f32 to vector<128x128xf32>
      %c0_11 = arith.constant 0 : index
      %c0_12 = arith.constant 0 : index
      %13 = vector.load %arg6[%c0_11, %c0_12] : memref<128x128xf32, #tpu.memory_space<vmem>>, vector<128x128xf32>
      tpu.vector_store %arg6[%c0_11, %c0_12], %12 {strides = array<i32>} : memref<128x128xf32, #tpu.memory_space<vmem>>, vector<128x128xf32>,
    } else {
    }
    %c0 = arith.constant 0 : index
    %c0_1 = arith.constant 0 : index
    %3 = vector.load %arg6[%c0, %c0_1] : memref<128x128xf32, #tpu.memory_space<vmem>>, vector<128x128xf32>
    %c0_2 = arith.constant 0 : index
    %c0_3 = arith.constant 0 : index
    %4 = vector.load %arg2[%c0_2, %c0_3] : memref<128x128xbf16, #tpu.memory_space<vmem>>, vector<128x128xbf16>
    %c0_4 = arith.constant 0 : index
    %c0_5 = arith.constant 0 : index
    %5 = vector.load %arg3[%c0_4, %c0_5] : memref<128x128xbf16, #tpu.memory_space<vmem>>, vector<128x128xbf16>
    %cst = arith.constant dense<0.000000e+00> : vector<128x128xf32>
    %6 = tpu.matmul %4, %5, %cst {dimension_numbers = #tpu.dot_dimension_numbers<[1], [0], [0], [1], [0, 0, 1, 1], [], []>} : vector<128x128xbf16>, vector<128x128xbf16>, vector<128x128xf32> -> vector<128x128xf32>
    %7 = arith.addf %3, %6 : vector<128x128xf32>
    %c0_6 = arith.constant 0 : index
    %c0_7 = arith.constant 0 : index
    %8 = vector.load %arg6[%c0_6, %c0_7] : memref<128x128xf32, #tpu.memory_space<vmem>>, vector<128x128xf32>
    tpu.vector_store %arg6[%c0_6, %c0_7], %7 {strides = array<i32>} : memref<128x128xf32, #tpu.memory_space<vmem>>, vector<128x128xf32>,
    %c0_i32_8 = arith.constant 0 : i32
    %9 = arith.cmpi eq, %arg1, %c0_i32_8 : i32
    %10 = arith.extui %9 : i1 to i32
    %c0_i32_9 = arith.constant 0 : i32
    %11 = arith.cmpi ne, %10, %c0_i32_9 : i32
    scf.if %11 {
      %c0_10 = arith.constant 0 : index
      %c0_11 = arith.constant 0 : index
      %12 = vector.load %arg6[%c0_10, %c0_11] : memref<128x128xf32, #tpu.memory_space<vmem>>, vector<128x128xf32>
      %c0_12 = arith.constant 0 : index
      %c0_13 = arith.constant 0 : index
      %13 = vector.load %arg4[%c0_12, %c0_13] : memref<1x128xf32, #tpu.memory_space<vmem>>, vector<1x128xf32>
      %14 = vector.broadcast %13 : vector<1x128xf32> to vector<128x128xf32>
      %15 = arith.addf %12, %14 : vector<128x128xf32>
      %cst_14 = arith.constant 0.000000e+00 : f32
      %16 = vector.broadcast %cst_14 : f32 to vector<128x128xf32>
      %17 = arith.maximumf %15, %16 : vector<128x128xf32>
      %18 = arith.truncf %17 : vector<128x128xf32> to vector<128x128xbf16>
      %c0_15 = arith.constant 0 : index
      %c0_16 = arith.constant 0 : index
      %19 = vector.load %arg5[%c0_15, %c0_16] : memref<128x128xbf16, #tpu.memory_space<vmem>>, vector<128x128xbf16>
      tpu.vector_store %arg5[%c0_15, %c0_16], %18 {strides = array<i32>} : memref<128x128xbf16, #tpu.memory_space<vmem>>, vector<128x128xbf16>,
    } else {
    }
    return
  }
  func.func @transform_0(%arg0: i32, %arg1: i32) -> (i32, i32) {
    %c0_i32 = arith.constant 0 : i32
    return %arg0, %arg1 : i32, i32
  }
  func.func @transform_1(%arg0: i32, %arg1: i32) -> (i32, i32) {
    %c0_i32 = arith.constant 0 : i32
    %c0_i32_0 = arith.constant 0 : i32
    return %arg1, %c0_i32 : i32, i32
  }
  func.func @transform_2(%arg0: i32, %arg1: i32) -> (i32, i32) {
    %c0_i32 = arith.constant 0 : i32
    %c0_i32_0 = arith.constant 0 : i32
    %c0_i32_1 = arith.constant 0 : i32
    return %c0_i32, %c0_i32_0 : i32, i32
  }
  func.func @transform_3(%arg0: i32, %arg1: i32) -> (i32, i32) {
    %c0_i32 = arith.constant 0 : i32
    %c0_i32_0 = arith.constant 0 : i32
    return %arg0, %c0_i32 : i32, i32
  }
}

module attributes {stable_mosaic.version = 11 : i64} {
  func.func @_matmul_bias_act_kernel(%arg0: i32, %arg1: i32, %arg2: memref<128x128xbf16, #tpu.memory_space<vmem>>, %arg3: memref<128x128xbf16, #tpu.memory_space<vmem>>, %arg4: memref<1x128xf32, #tpu.memory_space<vmem>>, %arg5: memref<128x128xf32, #tpu.memory_space<vmem>>, %arg6: memref<128x128xf32, #tpu.memory_space<vmem>>) attributes {dimension_semantics = [#tpu.dimension_semantics<parallel>, #tpu.dimension_semantics<arbitrary>], iteration_bounds = array<i64: 1, 1>, scalar_prefetch = 0 : i64, scratch_operands = 1 : i64, tpu.core_type = #tpu.core_type<tc>, window_params = [{transform_indices = @transform_0, window_bounds = array<i64: 128, 128>}, {transform_indices = @transform_1, window_bounds = array<i64: 128, 128>}, {pipeline_mode = #tpu.pipeline_mode<synchronous>, transform_indices = @transform_2, window_bounds = array<i64: 1, 128>}, {transform_indices = @transform_3, window_bounds = array<i64: 128, 128>}]} {
    %c0_i32 = arith.constant 0 : i32
    %0 = arith.cmpi eq, %arg1, %c0_i32 : i32
    %1 = arith.extui %0 : i1 to i32
    %c0_i32_0 = arith.constant 0 : i32
    %2 = arith.cmpi ne, %1, %c0_i32_0 : i32
    scf.if %2 {
      %cst_10 = arith.constant 0.000000e+00 : f32
      %12 = vector.broadcast %cst_10 : f32 to vector<128x128xf32>
      %c0_11 = arith.constant 0 : index
      %c0_12 = arith.constant 0 : index
      %13 = vector.load %arg6[%c0_11, %c0_12] : memref<128x128xf32, #tpu.memory_space<vmem>>, vector<128x128xf32>
      tpu.vector_store %arg6[%c0_11, %c0_12], %12 {strides = array<i32>} : memref<128x128xf32, #tpu.memory_space<vmem>>, vector<128x128xf32>,
    } else {
    }
    %c0 = arith.constant 0 : index
    %c0_1 = arith.constant 0 : index
    %3 = vector.load %arg6[%c0, %c0_1] : memref<128x128xf32, #tpu.memory_space<vmem>>, vector<128x128xf32>
    %c0_2 = arith.constant 0 : index
    %c0_3 = arith.constant 0 : index
    %4 = vector.load %arg2[%c0_2, %c0_3] : memref<128x128xbf16, #tpu.memory_space<vmem>>, vector<128x128xbf16>
    %c0_4 = arith.constant 0 : index
    %c0_5 = arith.constant 0 : index
    %5 = vector.load %arg3[%c0_4, %c0_5] : memref<128x128xbf16, #tpu.memory_space<vmem>>, vector<128x128xbf16>
    %cst = arith.constant dense<0.000000e+00> : vector<128x128xf32>
    %6 = tpu.matmul %4, %5, %cst {dimension_numbers = #tpu.dot_dimension_numbers<[1], [0], [0], [1], [0, 0, 1, 1], [], []>} : vector<128x128xbf16>, vector<128x128xbf16>, vector<128x128xf32> -> vector<128x128xf32>
    %7 = arith.addf %3, %6 : vector<128x128xf32>
    %c0_6 = arith.constant 0 : index
    %c0_7 = arith.constant 0 : index
    %8 = vector.load %arg6[%c0_6, %c0_7] : memref<128x128xf32, #tpu.memory_space<vmem>>, vector<128x128xf32>
    tpu.vector_store %arg6[%c0_6, %c0_7], %7 {strides = array<i32>} : memref<128x128xf32, #tpu.memory_space<vmem>>, vector<128x128xf32>,
    %c0_i32_8 = arith.constant 0 : i32
    %9 = arith.cmpi eq, %arg1, %c0_i32_8 : i32
    %10 = arith.extui %9 : i1 to i32
    %c0_i32_9 = arith.constant 0 : i32
    %11 = arith.cmpi ne, %10, %c0_i32_9 : i32
    scf.if %11 {
      %c0_10 = arith.constant 0 : index
      %c0_11 = arith.constant 0 : index
      %12 = vector.load %arg6[%c0_10, %c0_11] : memref<128x128xf32, #tpu.memory_space<vmem>>, vector<128x128xf32>
      %c0_12 = arith.constant 0 : index
      %c0_13 = arith.constant 0 : index
      %13 = vector.load %arg4[%c0_12, %c0_13] : memref<1x128xf32, #tpu.memory_space<vmem>>, vector<1x128xf32>
      %14 = vector.broadcast %13 : vector<1x128xf32> to vector<128x128xf32>
      %15 = arith.addf %12, %14 : vector<128x128xf32>
      %c0_14 = arith.constant 0 : index
      %c0_15 = arith.constant 0 : index
      %16 = vector.load %arg5[%c0_14, %c0_15] : memref<128x128xf32, #tpu.memory_space<vmem>>, vector<128x128xf32>
      tpu.vector_store %arg5[%c0_14, %c0_15], %15 {strides = array<i32>} : memref<128x128xf32, #tpu.memory_space<vmem>>, vector<128x128xf32>,
    } else {
    }
    return
  }
  func.func @transform_0(%arg0: i32, %arg1: i32) -> (i32, i32) {
    %c0_i32 = arith.constant 0 : i32
    return %arg0, %arg1 : i32, i32
  }
  func.func @transform_1(%arg0: i32, %arg1: i32) -> (i32, i32) {
    %c0_i32 = arith.constant 0 : i32
    %c0_i32_0 = arith.constant 0 : i32
    return %arg1, %c0_i32 : i32, i32
  }
  func.func @transform_2(%arg0: i32, %arg1: i32) -> (i32, i32) {
    %c0_i32 = arith.constant 0 : i32
    %c0_i32_0 = arith.constant 0 : i32
    %c0_i32_1 = arith.constant 0 : i32
    return %c0_i32, %c0_i32_0 : i32, i32
  }
  func.func @transform_3(%arg0: i32, %arg1: i32) -> (i32, i32) {
    %c0_i32 = arith.constant 0 : i32
    %c0_i32_0 = arith.constant 0 : i32
    return %arg0, %c0_i32 : i32, i32
  }
}

</mosaic_0001>

<llo_original>
// kernel: gcn_forward.4
$region0: #{gcn_forward.4}
  #allocation0 [shape = 'u32[]', space=smem, size = 0x4, offset = 0x4, fixed_abs, tag = 'smem constant byte address 0x4 - core index']
  #allocation1 [shape = 'u32[144,128]{1,0:T(1,128)}', space=vmem, size = 0x12000, scoped, tag = 'internal scratch']
  #allocation2 [shape = 'f32[128,128]{1,0:T(8,128)}', space=vmem, size = 0x10000, scoped, tag = 'scratch operand']
  %s0 = inlined_call_operand.vmem [shape: bf16[128,128], index: 0, kind: input, shape index: {}]
  %s1 = inlined_call_operand.vmem [shape: bf16[128,128], index: 1, kind: input, shape index: {}]
  %s2 = inlined_call_operand.vmem [shape: f32[1,128], index: 2, kind: input, shape index: {}]
  %s3 = inlined_call_operand.vmem [shape: bf16[128,128], index: 3, kind: output, shape index: {}]
  %s4 = sld [smem:[#allocation0]]
  $region30: #{gcn_forward.4} parent=0
    _
  %s6 = ssub.s32 1, %s4
  %s7 = scalar_select 0, %s6, %s4
  // Predicated region
  $region2: #{gcn_forward.4} parent=0 // pred_check
    _
  $region3: #{gcn_forward.4} parent=0 // pred_check_branch
    %9 = sbr.rel (0) target = $region5
  $region4: #{gcn_forward.4} parent=0 // pred_region
    _
  $region5: #{gcn_forward.4} parent=0 // pred_fallthru
    _
  // Predicated region
  $region6: #{gcn_forward.4} parent=0 // pred_check
    _
  $region7: #{gcn_forward.4} parent=0 // pred_check_branch
    %11 = sbr.rel (0) target = $region9
  $region8: #{gcn_forward.4} parent=0 // pred_region
    _
  $region9: #{gcn_forward.4} parent=0 // pred_fallthru
    _
  // Predicated region
  $region10: #{gcn_forward.4} parent=0 // pred_check
    _
  $region11: #{gcn_forward.4} parent=0 // pred_check_branch
    %13 = sbr.rel (0) target = $region13
  $region12: #{gcn_forward.4} parent=0 // pred_region
    _
  $region13: #{gcn_forward.4} parent=0 // pred_fallthru
    _
  %p15 = scmp.eq.s32.totalorder 0, 0
  // Predicated region
  $region14: #{gcn_forward.4} parent=0 // pred_check
    %p16 = pneg %p15
  $region15: #{gcn_forward.4} parent=0 // pred_check_branch
    %18 = sbr.rel (%p16) target = $region17
  $region16: #{gcn_forward.4} parent=0 // pred_region
    %19 = vst [vmem:[#allocation2] sm:$0xff] 0.0
    %20 = vst [vmem:[#allocation2 + $0x8] sm:$0xff] 0.0
    %21 = vst [vmem:[#allocation2 + $0x10] sm:$0xff] 0.0
    %22 = vst [vmem:[#allocation2 + $0x18] sm:$0xff] 0.0
    %23 = vst [vmem:[#allocation2 + $0x20] sm:$0xff] 0.0
    %24 = vst [vmem:[#allocation2 + $0x28] sm:$0xff] 0.0
    %25 = vst [vmem:[#allocation2 + $0x30] sm:$0xff] 0.0
    %26 = vst [vmem:[#allocation2 + $0x38] sm:$0xff] 0.0
    %27 = vst [vmem:[#allocation2 + $0x40] sm:$0xff] 0.0
    %28 = vst [vmem:[#allocation2 + $0x48] sm:$0xff] 0.0
    %29 = vst [vmem:[#allocation2 + $0x50] sm:$0xff] 0.0
    %30 = vst [vmem:[#allocation2 + $0x58] sm:$0xff] 0.0
    %31 = vst [vmem:[#allocation2 + $0x60] sm:$0xff] 0.0
    %32 = vst [vmem:[#allocation2 + $0x68] sm:$0xff] 0.0
    %33 = vst [vmem:[#allocation2 + $0x70] sm:$0xff] 0.0
    %34 = vst [vmem:[#allocation2 + $0x78] sm:$0xff] 0.0
  $region17: #{gcn_forward.4} parent=0 // pred_fallthru
    _
  %v35 = vld [vmem:[#allocation2] sm:$0xff]
  %v36 = vld [vmem:[#allocation2 + $0x8] sm:$0xff]
  %v37 = vld [vmem:[#allocation2 + $0x10] sm:$0xff]
  %v38 = vld [vmem:[#allocation2 + $0x18] sm:$0xff]
  %v39 = vld [vmem:[#allocation2 + $0x20] sm:$0xff]
  %v40 = vld [vmem:[#allocation2 + $0x28] sm:$0xff]
  %v41 = vld [vmem:[#allocation2 + $0x30] sm:$0xff]
  %v42 = vld [vmem:[#allocation2 + $0x38] sm:$0xff]
  %v43 = vld [vmem:[#allocation2 + $0x40] sm:$0xff]
  %v44 = vld [vmem:[#allocation2 + $0x48] sm:$0xff]
  %v45 = vld [vmem:[#allocation2 + $0x50] sm:$0xff]
  %v46 = vld [vmem:[#allocation2 + $0x58] sm:$0xff]
  %v47 = vld [vmem:[#allocation2 + $0x60] sm:$0xff]
  %v48 = vld [vmem:[#allocation2 + $0x68] sm:$0xff]
  %v49 = vld [vmem:[#allocation2 + $0x70] sm:$0xff]
  %v50 = vld [vmem:[#allocation2 + $0x78] sm:$0xff]
  %v51 = vld [vmem:[%s0] sm:$0xf]
  %v52 = vld [vmem:[%s0 + $0x4] sm:$0xf]
  %v53 = vld [vmem:[%s0 + $0x8] sm:$0xf]
  %v54 = vld [vmem:[%s0 + $0xc] sm:$0xf]
  %v55 = vld [vmem:[%s0 + $0x10] sm:$0xf]
  %v56 = vld [vmem:[%s0 + $0x14] sm:$0xf]
  %v57 = vld [vmem:[%s0 + $0x18] sm:$0xf]
  %v58 = vld [vmem:[%s0 + $0x1c] sm:$0xf]
  %v59 = vld [vmem:[%s0 + $0x20] sm:$0xf]
  %v60 = vld [vmem:[%s0 + $0x24] sm:$0xf]
  %v61 = vld [vmem:[%s0 + $0x28] sm:$0xf]
  %v62 = vld [vmem:[%s0 + $0x2c] sm:$0xf]
  %v63 = vld [vmem:[%s0 + $0x30] sm:$0xf]
  %v64 = vld [vmem:[%s0 + $0x34] sm:$0xf]
  %v65 = vld [vmem:[%s0 + $0x38] sm:$0xf]
  %v66 = vld [vmem:[%s0 + $0x3c] sm:$0xf]
  %v67 = vld [vmem:[%s1] sm:$0xf]
  %v68 = vld [vmem:[%s1 + $0x4] sm:$0xf]
  %v69 = vld [vmem:[%s1 + $0x8] sm:$0xf]
  %v70 = vld [vmem:[%s1 + $0xc] sm:$0xf]
  %v71 = vld [vmem:[%s1 + $0x10] sm:$0xf]
  %v72 = vld [vmem:[%s1 + $0x14] sm:$0xf]
  %v73 = vld [vmem:[%s1 + $0x18] sm:$0xf]
  %v74 = vld [vmem:[%s1 + $0x1c] sm:$0xf]
  %v75 = vld [vmem:[%s1 + $0x20] sm:$0xf]
  %v76 = vld [vmem:[%s1 + $0x24] sm:$0xf]
  %v77 = vld [vmem:[%s1 + $0x28] sm:$0xf]
  %v78 = vld [vmem:[%s1 + $0x2c] sm:$0xf]
  %v79 = vld [vmem:[%s1 + $0x30] sm:$0xf]
  %v80 = vld [vmem:[%s1 + $0x34] sm:$0xf]
  %v81 = vld [vmem:[%s1 + $0x38] sm:$0xf]
  %v82 = vld [vmem:[%s1 + $0x3c] sm:$0xf]
  %v99 = vunpack.c.l.b16 %v51
  %v100 = vunpack.c.l.b16 %v52
  %v101 = vunpack.c.l.b16 %v53
  %v102 = vunpack.c.l.b16 %v54
  %v103 = vunpack.c.l.b16 %v55
  %v104 = vunpack.c.l.b16 %v56
  %v105 = vunpack.c.l.b16 %v57
  %v106 = vunpack.c.l.b16 %v58
  %v107 = vunpack.c.l.b16 %v59
  %v108 = vunpack.c.l.b16 %v60
  %v109 = vunpack.c.l.b16 %v61
  %v110 = vunpack.c.l.b16 %v62
  %v111 = vunpack.c.l.b16 %v63
  %v112 = vunpack.c.l.b16 %v64
  %v113 = vunpack.c.l.b16 %v65
  %v114 = vunpack.c.l.b16 %v66
  %v115 = vpack.c.b16 %v100, %v99
  %v116 = vpack.c.b16 %v102, %v101
  %v117 = vpack.c.b16 %v104, %v103
  %v118 = vpack.c.b16 %v106, %v105
  %v119 = vpack.c.b16 %v108, %v107
  %v120 = vpack.c.b16 %v110, %v109
  %v121 = vpack.c.b16 %v112, %v111
  %v122 = vpack.c.b16 %v114, %v113
  %v147 = vunpack.c.l.b16 %v67
  %v148 = vunpack.c.l.b16 %v68
  %v149 = vunpack.c.l.b16 %v69
  %v150 = vunpack.c.l.b16 %v70
  %v151 = vunpack.c.l.b16 %v71
  %v152 = vunpack.c.l.b16 %v72
  %v153 = vunpack.c.l.b16 %v73
  %v154 = vunpack.c.l.b16 %v74
  %v155 = vunpack.c.l.b16 %v75
  %v156 = vunpack.c.l.b16 %v76
  %v157 = vunpack.c.l.b16 %v77
  %v158 = vunpack.c.l.b16 %v78
  %v159 = vunpack.c.l.b16 %v79
  %v160 = vunpack.c.l.b16 %v80
  %v161 = vunpack.c.l.b16 %v81
  %v162 = vunpack.c.l.b16 %v82
  %v163 = vpack.c.b16 %v148, %v147
  %v164 = vpack.c.b16 %v150, %v149
  %v165 = vpack.c.b16 %v152, %v151
  %v166 = vpack.c.b16 %v154, %v153
  %v167 = vpack.c.b16 %v156, %v155
  %v168 = vpack.c.b16 %v158, %v157
  %v169 = vpack.c.b16 %v160, %v159
  %v170 = vpack.c.b16 %v162, %v161
  %179 = vmatprep.subr.bf16.mxu0 0
  %180 = vmatpush1.bf16.msra.mxu0 %v163
  %181 = vmatprep.subr.bf16.mxu0 0
  %182 = vmatpush1.bf16.msra.mxu0 %v164
  %183 = vmatprep.subr.bf16.mxu0 0
  %184 = vmatpush1.bf16.msra.mxu0 %v165
  %185 = vmatprep.subr.bf16.mxu0 0
  %186 = vmatpush1.bf16.msra.mxu0 %v166
  %187 = vmatprep.subr.bf16.mxu0 0
  %188 = vmatpush1.bf16.msra.mxu0 %v167
  %189 = vmatprep.subr.bf16.mxu0 0
  %190 = vmatpush1.bf16.msra.mxu0 %v168
  %191 = vmatprep.subr.bf16.mxu0 0
  %192 = vmatpush1.bf16.msra.mxu0 %v169
  %193 = vmatprep.subr.bf16.mxu0 0
  %194 = vmatpush1.bf16.msra.mxu0 %v170
  %195 = vmatprep.subr.bf16.mxu0 0
  %196 = vmatpush1.bf16.msra.mxu0 0
  %197 = vmatprep.subr.bf16.mxu0 0
  %198 = vmatpush1.bf16.msra.mxu0 0
  %199 = vmatprep.subr.bf16.mxu0 0
  %200 = vmatpush1.bf16.msra.mxu0 0
  %201 = vmatprep.subr.bf16.mxu0 0
  %202 = vmatpush1.bf16.msra.mxu0 0
  %203 = vmatprep.subr.bf16.mxu0 0
  %204 = vmatpush1.bf16.msra.mxu0 0
  %205 = vmatprep.subr.bf16.mxu0 0
  %206 = vmatpush1.bf16.msra.mxu0 0
  %207 = vmatprep.subr.bf16.mxu0 0
  %208 = vmatpush1.bf16.msra.mxu0 0
  %209 = vmatprep.subr.bf16.mxu0 0
  %210 = vmatpush1.bf16.msra.mxu0 0
  %211 = vmatprep.mubr.bf16.mxu0 0
  %212 = vmatmul.mubr.bf16.gmra.mrb[0].mxu0 %v115
  %v213 = vpop.f32.mrb[0].mxu0
  %v214 = vadd.f32 0.0, %v213
  %v215 = vpop.f32.mrb[0].mxu0
  %v216 = vpop.f32.mrb[0].mxu0
  %v217 = vadd.f32 0.0, %v216
  %v218 = vpop.f32.mrb[0].mxu0
  %219 = vmatprep.mubr.bf16.mxu0 0
  %220 = vmatmul.mubr.bf16.gmra.mrb[0].mxu0 %v116
  %v221 = vpop.f32.mrb[0].mxu0
  %v222 = vadd.f32 0.0, %v221
  %v223 = vpop.f32.mrb[0].mxu0
  %v224 = vpop.f32.mrb[0].mxu0
  %v225 = vadd.f32 0.0, %v224
  %v226 = vpop.f32.mrb[0].mxu0
  %227 = vmatprep.mubr.bf16.mxu0 0
  %228 = vmatmul.mubr.bf16.gmra.mrb[0].mxu0 %v117
  %v229 = vpop.f32.mrb[0].mxu0
  %v230 = vadd.f32 0.0, %v229
  %v231 = vpop.f32.mrb[0].mxu0
  %v232 = vpop.f32.mrb[0].mxu0
  %v233 = vadd.f32 0.0, %v232
  %v234 = vpop.f32.mrb[0].mxu0
  %235 = vmatprep.mubr.bf16.mxu0 0
  %236 = vmatmul.mubr.bf16.gmra.mrb[0].mxu0 %v118
  %v237 = vpop.f32.mrb[0].mxu0
  %v238 = vadd.f32 0.0, %v237
  %v239 = vpop.f32.mrb[0].mxu0
  %v240 = vpop.f32.mrb[0].mxu0
  %v241 = vadd.f32 0.0, %v240
  %v242 = vpop.f32.mrb[0].mxu0
  %243 = vmatprep.mubr.bf16.mxu0 0
  %244 = vmatmul.mubr.bf16.gmra.mrb[0].mxu0 %v119
  %v245 = vpop.f32.mrb[0].mxu0
  %v246 = vadd.f32 0.0, %v245
  %v247 = vpop.f32.mrb[0].mxu0
  %v248 = vpop.f32.mrb[0].mxu0
  %v249 = vadd.f32 0.0, %v248
  %v250 = vpop.f32.mrb[0].mxu0
  %251 = vmatprep.mubr.bf16.mxu0 0
  %252 = vmatmul.mubr.bf16.gmra.mrb[0].mxu0 %v120
  %v253 = vpop.f32.mrb[0].mxu0
  %v254 = vadd.f32 0.0, %v253
  %v255 = vpop.f32.mrb[0].mxu0
  %v256 = vpop.f32.mrb[0].mxu0
  %v257 = vadd.f32 0.0, %v256
  %v258 = vpop.f32.mrb[0].mxu0
  %259 = vmatprep.mubr.bf16.mxu0 0
  %260 = vmatmul.mubr.bf16.gmra.mrb[0].mxu0 %v121
  %v261 = vpop.f32.mrb[0].mxu0
  %v262 = vadd.f32 0.0, %v261
  %v263 = vpop.f32.mrb[0].mxu0
  %v264 = vpop.f32.mrb[0].mxu0
  %v265 = vadd.f32 0.0, %v264
  %v266 = vpop.f32.mrb[0].mxu0
  %267 = vmatprep.mubr.bf16.mxu0 0
  %268 = vmatmul.mubr.bf16.gmra.mrb[0].mxu0 %v122
  %v269 = vpop.f32.mrb[0].mxu0
  %v270 = vadd.f32 0.0, %v269
  %v271 = vpop.f32.mrb[0].mxu0
  %v272 = vpop.f32.mrb[0].mxu0
  %v273 = vadd.f32 0.0, %v272
  %v274 = vpop.f32.mrb[0].mxu0
  %275 = vdwg.mxu0
  %v276 = vadd.f32 %v35, %v214
  %v277 = vadd.f32 %v36, %v217
  %v278 = vadd.f32 %v37, %v222
  %v279 = vadd.f32 %v38, %v225
  %v280 = vadd.f32 %v39, %v230
  %v281 = vadd.f32 %v40, %v233
  %v282 = vadd.f32 %v41, %v238
  %v283 = vadd.f32 %v42, %v241
  %v284 = vadd.f32 %v43, %v246
  %v285 = vadd.f32 %v44, %v249
  %v286 = vadd.f32 %v45, %v254
  %v287 = vadd.f32 %v46, %v257
  %v288 = vadd.f32 %v47, %v262
  %v289 = vadd.f32 %v48, %v265
  %v290 = vadd.f32 %v49, %v270
  %v291 = vadd.f32 %v50, %v273
  %292 = vst [vmem:[#allocation2] sm:$0xff] %v276
  %293 = vst [vmem:[#allocation2 + $0x8] sm:$0xff] %v277
  %294 = vst [vmem:[#allocation2 + $0x10] sm:$0xff] %v278
  %295 = vst [vmem:[#allocation2 + $0x18] sm:$0xff] %v279
  %296 = vst [vmem:[#allocation2 + $0x20] sm:$0xff] %v280
  %297 = vst [vmem:[#allocation2 + $0x28] sm:$0xff] %v281
  %298 = vst [vmem:[#allocation2 + $0x30] sm:$0xff] %v282
  %299 = vst [vmem:[#allocation2 + $0x38] sm:$0xff] %v283
  %300 = vst [vmem:[#allocation2 + $0x40] sm:$0xff] %v284
  %301 = vst [vmem:[#allocation2 + $0x48] sm:$0xff] %v285
  %302 = vst [vmem:[#allocation2 + $0x50] sm:$0xff] %v286
  %303 = vst [vmem:[#allocation2 + $0x58] sm:$0xff] %v287
  %304 = vst [vmem:[#allocation2 + $0x60] sm:$0xff] %v288
  %305 = vst [vmem:[#allocation2 + $0x68] sm:$0xff] %v289
  %306 = vst [vmem:[#allocation2 + $0x70] sm:$0xff] %v290
  %307 = vst [vmem:[#allocation2 + $0x78] sm:$0xff] %v291
  // Predicated region
  $region18: #{gcn_forward.4} parent=0 // pred_check
    %p308 = pneg %p15
  $region19: #{gcn_forward.4} parent=0 // pred_check_branch
    %310 = sbr.rel (%p308) target = $region21
  $region20: #{gcn_forward.4} parent=0 // pred_region
    %v311 = vld [vmem:[#allocation2] sm:$0xff]
    %v312 = vld [vmem:[#allocation2 + $0x8] sm:$0xff]
    %v313 = vld [vmem:[#allocation2 + $0x10] sm:$0xff]
    %v314 = vld [vmem:[#allocation2 + $0x18] sm:$0xff]
    %v315 = vld [vmem:[#allocation2 + $0x20] sm:$0xff]
    %v316 = vld [vmem:[#allocation2 + $0x28] sm:$0xff]
    %v317 = vld [vmem:[#allocation2 + $0x30] sm:$0xff]
    %v318 = vld [vmem:[#allocation2 + $0x38] sm:$0xff]
    %v319 = vld [vmem:[#allocation2 + $0x40] sm:$0xff]
    %v320 = vld [vmem:[#allocation2 + $0x48] sm:$0xff]
    %v321 = vld [vmem:[#allocation2 + $0x50] sm:$0xff]
    %v322 = vld [vmem:[#allocation2 + $0x58] sm:$0xff]
    %v323 = vld [vmem:[#allocation2 + $0x60] sm:$0xff]
    %v324 = vld [vmem:[#allocation2 + $0x68] sm:$0xff]
    %v325 = vld [vmem:[#allocation2 + $0x70] sm:$0xff]
    %v326 = vld [vmem:[#allocation2 + $0x78] sm:$0xff]
    %v327 = vld [vmem:[%s2] sm:$0x1]
    %v329 = vlaneseq
    %v330 = vshrl.u32 %v329, 7
    %v331 = vsub.s32 0, %v330
    %v332 = vrot.slane %v327, %v331
    %v334 = vadd.f32 %v311, %v332
    %v335 = vadd.f32 %v312, %v332
    %v336 = vadd.f32 %v313, %v332
    %v337 = vadd.f32 %v314, %v332
    %v338 = vadd.f32 %v315, %v332
    %v339 = vadd.f32 %v316, %v332
    %v340 = vadd.f32 %v317, %v332
    %v341 = vadd.f32 %v318, %v332
    %v342 = vadd.f32 %v319, %v332
    %v343 = vadd.f32 %v320, %v332
    %v344 = vadd.f32 %v321, %v332
    %v345 = vadd.f32 %v322, %v332
    %v346 = vadd.f32 %v323, %v332
    %v347 = vadd.f32 %v324, %v332
    %v348 = vadd.f32 %v325, %v332
    %v349 = vadd.f32 %v326, %v332
    %v350 = vpack.c.bf16 %v335, %v334
    %v351 = vpack.c.bf16 %v337, %v336
    %v352 = vpack.c.bf16 %v339, %v338
    %v353 = vpack.c.bf16 %v341, %v340
    %v354 = vpack.c.bf16 %v343, %v342
    %v355 = vpack.c.bf16 %v345, %v344
    %v356 = vpack.c.bf16 %v347, %v346
    %v357 = vpack.c.bf16 %v349, %v348
    %v366 = vunpack.c.l.b16 %v350
    %v367 = vunpack.c.h.b16 %v350
    %v368 = vunpack.c.l.b16 %v351
    %v369 = vunpack.c.h.b16 %v351
    %v370 = vunpack.c.l.b16 %v352
    %v371 = vunpack.c.h.b16 %v352
    %v372 = vunpack.c.l.b16 %v353
    %v373 = vunpack.c.h.b16 %v353
    %v374 = vunpack.c.l.b16 %v354
    %v375 = vunpack.c.h.b16 %v354
    %v376 = vunpack.c.l.b16 %v355
    %v377 = vunpack.c.h.b16 %v355
    %v378 = vunpack.c.l.b16 %v356
    %v379 = vunpack.c.h.b16 %v356
    %v380 = vunpack.c.l.b16 %v357
    %v381 = vunpack.c.h.b16 %v357
    %v382 = vpack.c.b16 %v366, %v366
    %v383 = vpack.c.b16 %v367, %v367
    %v384 = vpack.c.b16 %v368, %v368
    %v385 = vpack.c.b16 %v369, %v369
    %v386 = vpack.c.b16 %v370, %v370
    %v387 = vpack.c.b16 %v371, %v371
    %v388 = vpack.c.b16 %v372, %v372
    %v389 = vpack.c.b16 %v373, %v373
    %v390 = vpack.c.b16 %v374, %v374
    %v391 = vpack.c.b16 %v375, %v375
    %v392 = vpack.c.b16 %v376, %v376
    %v393 = vpack.c.b16 %v377, %v377
    %v394 = vpack.c.b16 %v378, %v378
    %v395 = vpack.c.b16 %v379, %v379
    %v396 = vpack.c.b16 %v380, %v380
    %v397 = vpack.c.b16 %v381, %v381
    %414 = vst [vmem:[%s3] sm:$0xf] %v382
    %415 = vst [vmem:[%s3 + $0x4] sm:$0xf] %v383
    %416 = vst [vmem:[%s3 + $0x8] sm:$0xf] %v384
    %417 = vst [vmem:[%s3 + $0xc] sm:$0xf] %v385
    %418 = vst [vmem:[%s3 + $0x10] sm:$0xf] %v386
    %419 = vst [vmem:[%s3 + $0x14] sm:$0xf] %v387
    %420 = vst [vmem:[%s3 + $0x18] sm:$0xf] %v388
    %421 = vst [vmem:[%s3 + $0x1c] sm:$0xf] %v389
    %422 = vst [vmem:[%s3 + $0x20] sm:$0xf] %v390
    %423 = vst [vmem:[%s3 + $0x24] sm:$0xf] %v391
    %424 = vst [vmem:[%s3 + $0x28] sm:$0xf] %v392
    %425 = vst [vmem:[%s3 + $0x2c] sm:$0xf] %v393
    %426 = vst [vmem:[%s3 + $0x30] sm:$0xf] %v394
    %427 = vst [vmem:[%s3 + $0x34] sm:$0xf] %v395
    %428 = vst [vmem:[%s3 + $0x38] sm:$0xf] %v396
    %429 = vst [vmem:[%s3 + $0x3c] sm:$0xf] %v397
  $region21: #{gcn_forward.4} parent=0 // pred_fallthru
    _
  // Predicated region
  $region22: #{gcn_forward.4} parent=0 // pred_check
    _
  $region23: #{gcn_forward.4} parent=0 // pred_check_branch
    %431 = sbr.rel (0) target = $region25
  $region24: #{gcn_forward.4} parent=0 // pred_region
    _
  $region25: #{gcn_forward.4} parent=0 // pred_fallthru
    _
  // Predicated region
  $region26: #{gcn_forward.4} parent=0 // pred_check
    _
  $region27: #{gcn_forward.4} parent=0 // pred_check_branch
    %433 = sbr.rel (0) target = $region29
  $region28: #{gcn_forward.4} parent=0 // pred_region
    _
  $region29: #{gcn_forward.4} parent=0 // pred_fallthru
    _

// kernel: gcn_forward.5
$region0: #{gcn_forward.5}
  #allocation0 [shape = 'u32[]', space=smem, size = 0x4, offset = 0x4, fixed_abs, tag = 'smem constant byte address 0x4 - core index']
  #allocation1 [shape = 'u32[144,128]{1,0:T(1,128)}', space=vmem, size = 0x12000, scoped, tag = 'internal scratch']
  #allocation2 [shape = 'f32[128,128]{1,0:T(8,128)}', space=vmem, size = 0x10000, scoped, tag = 'scratch operand']
  %s0 = inlined_call_operand.vmem [shape: bf16[128,128], index: 0, kind: input, shape index: {}]
  %s1 = inlined_call_operand.vmem [shape: bf16[128,128], index: 1, kind: input, shape index: {}]
  %s2 = inlined_call_operand.vmem [shape: f32[1,128], index: 2, kind: input, shape index: {}]
  %s3 = inlined_call_operand.vmem [shape: bf16[128,128], index: 3, kind: output, shape index: {}]
  %s4 = sld [smem:[#allocation0]]
  $region30: #{gcn_forward.5} parent=0
    _
  %s6 = ssub.s32 1, %s4
  %s7 = scalar_select 0, %s6, %s4
  // Predicated region
  $region2: #{gcn_forward.5} parent=0 // pred_check
    _
  $region3: #{gcn_forward.5} parent=0 // pred_check_branch
    %9 = sbr.rel (0) target = $region5
  $region4: #{gcn_forward.5} parent=0 // pred_region
    _
  $region5: #{gcn_forward.5} parent=0 // pred_fallthru
    _
  // Predicated region
  $region6: #{gcn_forward.5} parent=0 // pred_check
    _
  $region7: #{gcn_forward.5} parent=0 // pred_check_branch
    %11 = sbr.rel (0) target = $region9
  $region8: #{gcn_forward.5} parent=0 // pred_region
    _
  $region9: #{gcn_forward.5} parent=0 // pred_fallthru
    _
  // Predicated region
  $region10: #{gcn_forward.5} parent=0 // pred_check
    _
  $region11: #{gcn_forward.5} parent=0 // pred_check_branch
    %13 = sbr.rel (0) target = $region13
  $region12: #{gcn_forward.5} parent=0 // pred_region
    _
  $region13: #{gcn_forward.5} parent=0 // pred_fallthru
    _
  %p15 = scmp.eq.s32.totalorder 0, 0
  // Predicated region
  $region14: #{gcn_forward.5} parent=0 // pred_check
    %p16 = pneg %p15
  $region15: #{gcn_forward.5} parent=0 // pred_check_branch
    %18 = sbr.rel (%p16) target = $region17
  $region16: #{gcn_forward.5} parent=0 // pred_region
    %19 = vst [vmem:[#allocation2] sm:$0xff] 0.0
    %20 = vst [vmem:[#allocation2 + $0x8] sm:$0xff] 0.0
    %21 = vst [vmem:[#allocation2 + $0x10] sm:$0xff] 0.0
    %22 = vst [vmem:[#allocation2 + $0x18] sm:$0xff] 0.0
    %23 = vst [vmem:[#allocation2 + $0x20] sm:$0xff] 0.0
    %24 = vst [vmem:[#allocation2 + $0x28] sm:$0xff] 0.0
    %25 = vst [vmem:[#allocation2 + $0x30] sm:$0xff] 0.0
    %26 = vst [vmem:[#allocation2 + $0x38] sm:$0xff] 0.0
    %27 = vst [vmem:[#allocation2 + $0x40] sm:$0xff] 0.0
    %28 = vst [vmem:[#allocation2 + $0x48] sm:$0xff] 0.0
    %29 = vst [vmem:[#allocation2 + $0x50] sm:$0xff] 0.0
    %30 = vst [vmem:[#allocation2 + $0x58] sm:$0xff] 0.0
    %31 = vst [vmem:[#allocation2 + $0x60] sm:$0xff] 0.0
    %32 = vst [vmem:[#allocation2 + $0x68] sm:$0xff] 0.0
    %33 = vst [vmem:[#allocation2 + $0x70] sm:$0xff] 0.0
    %34 = vst [vmem:[#allocation2 + $0x78] sm:$0xff] 0.0
  $region17: #{gcn_forward.5} parent=0 // pred_fallthru
    _
  %v35 = vld [vmem:[#allocation2] sm:$0xff]
  %v36 = vld [vmem:[#allocation2 + $0x8] sm:$0xff]
  %v37 = vld [vmem:[#allocation2 + $0x10] sm:$0xff]
  %v38 = vld [vmem:[#allocation2 + $0x18] sm:$0xff]
  %v39 = vld [vmem:[#allocation2 + $0x20] sm:$0xff]
  %v40 = vld [vmem:[#allocation2 + $0x28] sm:$0xff]
  %v41 = vld [vmem:[#allocation2 + $0x30] sm:$0xff]
  %v42 = vld [vmem:[#allocation2 + $0x38] sm:$0xff]
  %v43 = vld [vmem:[#allocation2 + $0x40] sm:$0xff]
  %v44 = vld [vmem:[#allocation2 + $0x48] sm:$0xff]
  %v45 = vld [vmem:[#allocation2 + $0x50] sm:$0xff]
  %v46 = vld [vmem:[#allocation2 + $0x58] sm:$0xff]
  %v47 = vld [vmem:[#allocation2 + $0x60] sm:$0xff]
  %v48 = vld [vmem:[#allocation2 + $0x68] sm:$0xff]
  %v49 = vld [vmem:[#allocation2 + $0x70] sm:$0xff]
  %v50 = vld [vmem:[#allocation2 + $0x78] sm:$0xff]
  %v51 = vld [vmem:[%s0] sm:$0xf]
  %v52 = vld [vmem:[%s0 + $0x4] sm:$0xf]
  %v53 = vld [vmem:[%s0 + $0x8] sm:$0xf]
  %v54 = vld [vmem:[%s0 + $0xc] sm:$0xf]
  %v55 = vld [vmem:[%s0 + $0x10] sm:$0xf]
  %v56 = vld [vmem:[%s0 + $0x14] sm:$0xf]
  %v57 = vld [vmem:[%s0 + $0x18] sm:$0xf]
  %v58 = vld [vmem:[%s0 + $0x1c] sm:$0xf]
  %v59 = vld [vmem:[%s0 + $0x20] sm:$0xf]
  %v60 = vld [vmem:[%s0 + $0x24] sm:$0xf]
  %v61 = vld [vmem:[%s0 + $0x28] sm:$0xf]
  %v62 = vld [vmem:[%s0 + $0x2c] sm:$0xf]
  %v63 = vld [vmem:[%s0 + $0x30] sm:$0xf]
  %v64 = vld [vmem:[%s0 + $0x34] sm:$0xf]
  %v65 = vld [vmem:[%s0 + $0x38] sm:$0xf]
  %v66 = vld [vmem:[%s0 + $0x3c] sm:$0xf]
  %v67 = vld [vmem:[%s1] sm:$0xf]
  %v68 = vld [vmem:[%s1 + $0x4] sm:$0xf]
  %v69 = vld [vmem:[%s1 + $0x8] sm:$0xf]
  %v70 = vld [vmem:[%s1 + $0xc] sm:$0xf]
  %v71 = vld [vmem:[%s1 + $0x10] sm:$0xf]
  %v72 = vld [vmem:[%s1 + $0x14] sm:$0xf]
  %v73 = vld [vmem:[%s1 + $0x18] sm:$0xf]
  %v74 = vld [vmem:[%s1 + $0x1c] sm:$0xf]
  %v75 = vld [vmem:[%s1 + $0x20] sm:$0xf]
  %v76 = vld [vmem:[%s1 + $0x24] sm:$0xf]
  %v77 = vld [vmem:[%s1 + $0x28] sm:$0xf]
  %v78 = vld [vmem:[%s1 + $0x2c] sm:$0xf]
  %v79 = vld [vmem:[%s1 + $0x30] sm:$0xf]
  %v80 = vld [vmem:[%s1 + $0x34] sm:$0xf]
  %v81 = vld [vmem:[%s1 + $0x38] sm:$0xf]
  %v82 = vld [vmem:[%s1 + $0x3c] sm:$0xf]
  %v99 = vunpack.c.l.b16 %v51
  %v100 = vunpack.c.l.b16 %v52
  %v101 = vunpack.c.l.b16 %v53
  %v102 = vunpack.c.l.b16 %v54
  %v103 = vunpack.c.l.b16 %v55
  %v104 = vunpack.c.l.b16 %v56
  %v105 = vunpack.c.l.b16 %v57
  %v106 = vunpack.c.l.b16 %v58
  %v107 = vunpack.c.l.b16 %v59
  %v108 = vunpack.c.l.b16 %v60
  %v109 = vunpack.c.l.b16 %v61
  %v110 = vunpack.c.l.b16 %v62
  %v111 = vunpack.c.l.b16 %v63
  %v112 = vunpack.c.l.b16 %v64
  %v113 = vunpack.c.l.b16 %v65
  %v114 = vunpack.c.l.b16 %v66
  %v115 = vpack.c.b16 %v100, %v99
  %v116 = vpack.c.b16 %v102, %v101
  %v117 = vpack.c.b16 %v104, %v103
  %v118 = vpack.c.b16 %v106, %v105
  %v119 = vpack.c.b16 %v108, %v107
  %v120 = vpack.c.b16 %v110, %v109
  %v121 = vpack.c.b16 %v112, %v111
  %v122 = vpack.c.b16 %v114, %v113
  %v147 = vunpack.c.l.b16 %v67
  %v148 = vunpack.c.l.b16 %v68
  %v149 = vunpack.c.l.b16 %v69
  %v150 = vunpack.c.l.b16 %v70
  %v151 = vunpack.c.l.b16 %v71
  %v152 = vunpack.c.l.b16 %v72
  %v153 = vunpack.c.l.b16 %v73
  %v154 = vunpack.c.l.b16 %v74
  %v155 = vunpack.c.l.b16 %v75
  %v156 = vunpack.c.l.b16 %v76
  %v157 = vunpack.c.l.b16 %v77
  %v158 = vunpack.c.l.b16 %v78
  %v159 = vunpack.c.l.b16 %v79
  %v160 = vunpack.c.l.b16 %v80
  %v161 = vunpack.c.l.b16 %v81
  %v162 = vunpack.c.l.b16 %v82
  %v163 = vpack.c.b16 %v148, %v147
  %v164 = vpack.c.b16 %v150, %v149
  %v165 = vpack.c.b16 %v152, %v151
  %v166 = vpack.c.b16 %v154, %v153
  %v167 = vpack.c.b16 %v156, %v155
  %v168 = vpack.c.b16 %v158, %v157
  %v169 = vpack.c.b16 %v160, %v159
  %v170 = vpack.c.b16 %v162, %v161
  %179 = vmatprep.subr.bf16.mxu0 0
  %180 = vmatpush1.bf16.msra.mxu0 %v163
  %181 = vmatprep.subr.bf16.mxu0 0
  %182 = vmatpush1.bf16.msra.mxu0 %v164
  %183 = vmatprep.subr.bf16.mxu0 0
  %184 = vmatpush1.bf16.msra.mxu0 %v165
  %185 = vmatprep.subr.bf16.mxu0 0
  %186 = vmatpush1.bf16.msra.mxu0 %v166
  %187 = vmatprep.subr.bf16.mxu0 0
  %188 = vmatpush1.bf16.msra.mxu0 %v167
  %189 = vmatprep.subr.bf16.mxu0 0
  %190 = vmatpush1.bf16.msra.mxu0 %v168
  %191 = vmatprep.subr.bf16.mxu0 0
  %192 = vmatpush1.bf16.msra.mxu0 %v169
  %193 = vmatprep.subr.bf16.mxu0 0
  %194 = vmatpush1.bf16.msra.mxu0 %v170
  %195 = vmatprep.subr.bf16.mxu0 0
  %196 = vmatpush1.bf16.msra.mxu0 0
  %197 = vmatprep.subr.bf16.mxu0 0
  %198 = vmatpush1.bf16.msra.mxu0 0
  %199 = vmatprep.subr.bf16.mxu0 0
  %200 = vmatpush1.bf16.msra.mxu0 0
  %201 = vmatprep.subr.bf16.mxu0 0
  %202 = vmatpush1.bf16.msra.mxu0 0
  %203 = vmatprep.subr.bf16.mxu0 0
  %204 = vmatpush1.bf16.msra.mxu0 0
  %205 = vmatprep.subr.bf16.mxu0 0
  %206 = vmatpush1.bf16.msra.mxu0 0
  %207 = vmatprep.subr.bf16.mxu0 0
  %208 = vmatpush1.bf16.msra.mxu0 0
  %209 = vmatprep.subr.bf16.mxu0 0
  %210 = vmatpush1.bf16.msra.mxu0 0
  %211 = vmatprep.mubr.bf16.mxu0 0
  %212 = vmatmul.mubr.bf16.gmra.mrb[0].mxu0 %v115
  %v213 = vpop.f32.mrb[0].mxu0
  %v214 = vadd.f32 0.0, %v213
  %v215 = vpop.f32.mrb[0].mxu0
  %v216 = vpop.f32.mrb[0].mxu0
  %v217 = vadd.f32 0.0, %v216
  %v218 = vpop.f32.mrb[0].mxu0
  %219 = vmatprep.mubr.bf16.mxu0 0
  %220 = vmatmul.mubr.bf16.gmra.mrb[0].mxu0 %v116
  %v221 = vpop.f32.mrb[0].mxu0
  %v222 = vadd.f32 0.0, %v221
  %v223 = vpop.f32.mrb[0].mxu0
  %v224 = vpop.f32.mrb[0].mxu0
  %v225 = vadd.f32 0.0, %v224
  %v226 = vpop.f32.mrb[0].mxu0
  %227 = vmatprep.mubr.bf16.mxu0 0
  %228 = vmatmul.mubr.bf16.gmra.mrb[0].mxu0 %v117
  %v229 = vpop.f32.mrb[0].mxu0
  %v230 = vadd.f32 0.0, %v229
  %v231 = vpop.f32.mrb[0].mxu0
  %v232 = vpop.f32.mrb[0].mxu0
  %v233 = vadd.f32 0.0, %v232
  %v234 = vpop.f32.mrb[0].mxu0
  %235 = vmatprep.mubr.bf16.mxu0 0
  %236 = vmatmul.mubr.bf16.gmra.mrb[0].mxu0 %v118
  %v237 = vpop.f32.mrb[0].mxu0
  %v238 = vadd.f32 0.0, %v237
  %v239 = vpop.f32.mrb[0].mxu0
  %v240 = vpop.f32.mrb[0].mxu0
  %v241 = vadd.f32 0.0, %v240
  %v242 = vpop.f32.mrb[0].mxu0
  %243 = vmatprep.mubr.bf16.mxu0 0
  %244 = vmatmul.mubr.bf16.gmra.mrb[0].mxu0 %v119
  %v245 = vpop.f32.mrb[0].mxu0
  %v246 = vadd.f32 0.0, %v245
  %v247 = vpop.f32.mrb[0].mxu0
  %v248 = vpop.f32.mrb[0].mxu0
  %v249 = vadd.f32 0.0, %v248
  %v250 = vpop.f32.mrb[0].mxu0
  %251 = vmatprep.mubr.bf16.mxu0 0
  %252 = vmatmul.mubr.bf16.gmra.mrb[0].mxu0 %v120
  %v253 = vpop.f32.mrb[0].mxu0
  %v254 = vadd.f32 0.0, %v253
  %v255 = vpop.f32.mrb[0].mxu0
  %v256 = vpop.f32.mrb[0].mxu0
  %v257 = vadd.f32 0.0, %v256
  %v258 = vpop.f32.mrb[0].mxu0
  %259 = vmatprep.mubr.bf16.mxu0 0
  %260 = vmatmul.mubr.bf16.gmra.mrb[0].mxu0 %v121
  %v261 = vpop.f32.mrb[0].mxu0
  %v262 = vadd.f32 0.0, %v261
  %v263 = vpop.f32.mrb[0].mxu0
  %v264 = vpop.f32.mrb[0].mxu0
  %v265 = vadd.f32 0.0, %v264
  %v266 = vpop.f32.mrb[0].mxu0
  %267 = vmatprep.mubr.bf16.mxu0 0
  %268 = vmatmul.mubr.bf16.gmra.mrb[0].mxu0 %v122
  %v269 = vpop.f32.mrb[0].mxu0
  %v270 = vadd.f32 0.0, %v269
  %v271 = vpop.f32.mrb[0].mxu0
  %v272 = vpop.f32.mrb[0].mxu0
  %v273 = vadd.f32 0.0, %v272
  %v274 = vpop.f32.mrb[0].mxu0
  %275 = vdwg.mxu0
  %v276 = vadd.f32 %v35, %v214
  %v277 = vadd.f32 %v36, %v217
  %v278 = vadd.f32 %v37, %v222
  %v279 = vadd.f32 %v38, %v225
  %v280 = vadd.f32 %v39, %v230
  %v281 = vadd.f32 %v40, %v233
  %v282 = vadd.f32 %v41, %v238
  %v283 = vadd.f32 %v42, %v241
  %v284 = vadd.f32 %v43, %v246
  %v285 = vadd.f32 %v44, %v249
  %v286 = vadd.f32 %v45, %v254
  %v287 = vadd.f32 %v46, %v257
  %v288 = vadd.f32 %v47, %v262
  %v289 = vadd.f32 %v48, %v265
  %v290 = vadd.f32 %v49, %v270
  %v291 = vadd.f32 %v50, %v273
  %292 = vst [vmem:[#allocation2] sm:$0xff] %v276
  %293 = vst [vmem:[#allocation2 + $0x8] sm:$0xff] %v277
  %294 = vst [vmem:[#allocation2 + $0x10] sm:$0xff] %v278
  %295 = vst [vmem:[#allocation2 + $0x18] sm:$0xff] %v279
  %296 = vst [vmem:[#allocation2 + $0x20] sm:$0xff] %v280
  %297 = vst [vmem:[#allocation2 + $0x28] sm:$0xff] %v281
  %298 = vst [vmem:[#allocation2 + $0x30] sm:$0xff] %v282
  %299 = vst [vmem:[#allocation2 + $0x38] sm:$0xff] %v283
  %300 = vst [vmem:[#allocation2 + $0x40] sm:$0xff] %v284
  %301 = vst [vmem:[#allocation2 + $0x48] sm:$0xff] %v285
  %302 = vst [vmem:[#allocation2 + $0x50] sm:$0xff] %v286
  %303 = vst [vmem:[#allocation2 + $0x58] sm:$0xff] %v287
  %304 = vst [vmem:[#allocation2 + $0x60] sm:$0xff] %v288
  %305 = vst [vmem:[#allocation2 + $0x68] sm:$0xff] %v289
  %306 = vst [vmem:[#allocation2 + $0x70] sm:$0xff] %v290
  %307 = vst [vmem:[#allocation2 + $0x78] sm:$0xff] %v291
  // Predicated region
  $region18: #{gcn_forward.5} parent=0 // pred_check
    %p308 = pneg %p15
  $region19: #{gcn_forward.5} parent=0 // pred_check_branch
    %310 = sbr.rel (%p308) target = $region21
  $region20: #{gcn_forward.5} parent=0 // pred_region
    %v311 = vld [vmem:[#allocation2] sm:$0xff]
    %v312 = vld [vmem:[#allocation2 + $0x8] sm:$0xff]
    %v313 = vld [vmem:[#allocation2 + $0x10] sm:$0xff]
    %v314 = vld [vmem:[#allocation2 + $0x18] sm:$0xff]
    %v315 = vld [vmem:[#allocation2 + $0x20] sm:$0xff]
    %v316 = vld [vmem:[#allocation2 + $0x28] sm:$0xff]
    %v317 = vld [vmem:[#allocation2 + $0x30] sm:$0xff]
    %v318 = vld [vmem:[#allocation2 + $0x38] sm:$0xff]
    %v319 = vld [vmem:[#allocation2 + $0x40] sm:$0xff]
    %v320 = vld [vmem:[#allocation2 + $0x48] sm:$0xff]
    %v321 = vld [vmem:[#allocation2 + $0x50] sm:$0xff]
    %v322 = vld [vmem:[#allocation2 + $0x58] sm:$0xff]
    %v323 = vld [vmem:[#allocation2 + $0x60] sm:$0xff]
    %v324 = vld [vmem:[#allocation2 + $0x68] sm:$0xff]
    %v325 = vld [vmem:[#allocation2 + $0x70] sm:$0xff]
    %v326 = vld [vmem:[#allocation2 + $0x78] sm:$0xff]
    %v327 = vld [vmem:[%s2] sm:$0x1]
    %v329 = vlaneseq
    %v330 = vshrl.u32 %v329, 7
    %v331 = vsub.s32 0, %v330
    %v332 = vrot.slane %v327, %v331
    %v334 = vadd.f32 %v311, %v332
    %v335 = vadd.f32 %v312, %v332
    %v336 = vadd.f32 %v313, %v332
    %v337 = vadd.f32 %v314, %v332
    %v338 = vadd.f32 %v315, %v332
    %v339 = vadd.f32 %v316, %v332
    %v340 = vadd.f32 %v317, %v332
    %v341 = vadd.f32 %v318, %v332
    %v342 = vadd.f32 %v319, %v332
    %v343 = vadd.f32 %v320, %v332
    %v344 = vadd.f32 %v321, %v332
    %v345 = vadd.f32 %v322, %v332
    %v346 = vadd.f32 %v323, %v332
    %v347 = vadd.f32 %v324, %v332
    %v348 = vadd.f32 %v325, %v332
    %v349 = vadd.f32 %v326, %v332
    %v350 = vmax.f32 %v334, 0.0
    %v351 = vmax.f32 %v335, 0.0
    %v352 = vmax.f32 %v336, 0.0
    %v353 = vmax.f32 %v337, 0.0
    %v354 = vmax.f32 %v338, 0.0
    %v355 = vmax.f32 %v339, 0.0
    %v356 = vmax.f32 %v340, 0.0
    %v357 = vmax.f32 %v341, 0.0
    %v358 = vmax.f32 %v342, 0.0
    %v359 = vmax.f32 %v343, 0.0
    %v360 = vmax.f32 %v344, 0.0
    %v361 = vmax.f32 %v345, 0.0
    %v362 = vmax.f32 %v346, 0.0
    %v363 = vmax.f32 %v347, 0.0
    %v364 = vmax.f32 %v348, 0.0
    %v365 = vmax.f32 %v349, 0.0
    %v366 = vpack.c.bf16 %v351, %v350
    %v367 = vpack.c.bf16 %v353, %v352
    %v368 = vpack.c.bf16 %v355, %v354
    %v369 = vpack.c.bf16 %v357, %v356
    %v370 = vpack.c.bf16 %v359, %v358
    %v371 = vpack.c.bf16 %v361, %v360
    %v372 = vpack.c.bf16 %v363, %v362
    %v373 = vpack.c.bf16 %v365, %v364
    %v382 = vunpack.c.l.b16 %v366
    %v383 = vunpack.c.h.b16 %v366
    %v384 = vunpack.c.l.b16 %v367
    %v385 = vunpack.c.h.b16 %v367
    %v386 = vunpack.c.l.b16 %v368
    %v387 = vunpack.c.h.b16 %v368
    %v388 = vunpack.c.l.b16 %v369
    %v389 = vunpack.c.h.b16 %v369
    %v390 = vunpack.c.l.b16 %v370
    %v391 = vunpack.c.h.b16 %v370
    %v392 = vunpack.c.l.b16 %v371
    %v393 = vunpack.c.h.b16 %v371
    %v394 = vunpack.c.l.b16 %v372
    %v395 = vunpack.c.h.b16 %v372
    %v396 = vunpack.c.l.b16 %v373
    %v397 = vunpack.c.h.b16 %v373
    %v398 = vpack.c.b16 %v382, %v382
    %v399 = vpack.c.b16 %v383, %v383
    %v400 = vpack.c.b16 %v384, %v384
    %v401 = vpack.c.b16 %v385, %v385
    %v402 = vpack.c.b16 %v386, %v386
    %v403 = vpack.c.b16 %v387, %v387
    %v404 = vpack.c.b16 %v388, %v388
    %v405 = vpack.c.b16 %v389, %v389
    %v406 = vpack.c.b16 %v390, %v390
    %v407 = vpack.c.b16 %v391, %v391
    %v408 = vpack.c.b16 %v392, %v392
    %v409 = vpack.c.b16 %v393, %v393
    %v410 = vpack.c.b16 %v394, %v394
    %v411 = vpack.c.b16 %v395, %v395
    %v412 = vpack.c.b16 %v396, %v396
    %v413 = vpack.c.b16 %v397, %v397
    %430 = vst [vmem:[%s3] sm:$0xf] %v398
    %431 = vst [vmem:[%s3 + $0x4] sm:$0xf] %v399
    %432 = vst [vmem:[%s3 + $0x8] sm:$0xf] %v400
    %433 = vst [vmem:[%s3 + $0xc] sm:$0xf] %v401
    %434 = vst [vmem:[%s3 + $0x10] sm:$0xf] %v402
    %435 = vst [vmem:[%s3 + $0x14] sm:$0xf] %v403
    %436 = vst [vmem:[%s3 + $0x18] sm:$0xf] %v404
    %437 = vst [vmem:[%s3 + $0x1c] sm:$0xf] %v405
    %438 = vst [vmem:[%s3 + $0x20] sm:$0xf] %v406
    %439 = vst [vmem:[%s3 + $0x24] sm:$0xf] %v407
    %440 = vst [vmem:[%s3 + $0x28] sm:$0xf] %v408
    %441 = vst [vmem:[%s3 + $0x2c] sm:$0xf] %v409
    %442 = vst [vmem:[%s3 + $0x30] sm:$0xf] %v410
    %443 = vst [vmem:[%s3 + $0x34] sm:$0xf] %v411
    %444 = vst [vmem:[%s3 + $0x38] sm:$0xf] %v412
    %445 = vst [vmem:[%s3 + $0x3c] sm:$0xf] %v413
  $region21: #{gcn_forward.5} parent=0 // pred_fallthru
    _
  // Predicated region
  $region22: #{gcn_forward.5} parent=0 // pred_check
    _
  $region23: #{gcn_forward.5} parent=0 // pred_check_branch
    %447 = sbr.rel (0) target = $region25
  $region24: #{gcn_forward.5} parent=0 // pred_region
    _
  $region25: #{gcn_forward.5} parent=0 // pred_fallthru
    _
  // Predicated region
  $region26: #{gcn_forward.5} parent=0 // pred_check
    _
  $region27: #{gcn_forward.5} parent=0 // pred_check_branch
    %449 = sbr.rel (0) target = $region29
  $region28: #{gcn_forward.5} parent=0 // pred_region
    _
  $region29: #{gcn_forward.5} parent=0 // pred_fallthru
    _

// kernel: gcn_forward.7
$region0: #{gcn_forward.7}
  #allocation0 [shape = 'u32[]', space=smem, size = 0x4, offset = 0x4, fixed_abs, tag = 'smem constant byte address 0x4 - core index']
  #allocation1 [shape = 'u32[144,128]{1,0:T(1,128)}', space=vmem, size = 0x12000, scoped, tag = 'internal scratch']
  #allocation2 [shape = 'f32[128,128]{1,0:T(8,128)}', space=vmem, size = 0x10000, scoped, tag = 'scratch operand']
  %s0 = inlined_call_operand.vmem [shape: bf16[128,128], index: 0, kind: input, shape index: {}]
  %s1 = inlined_call_operand.vmem [shape: bf16[128,128], index: 1, kind: input, shape index: {}]
  %s2 = inlined_call_operand.vmem [shape: f32[1,128], index: 2, kind: input, shape index: {}]
  %s3 = inlined_call_operand.vmem [shape: f32[128,128], index: 3, kind: output, shape index: {}]
  %s4 = sld [smem:[#allocation0]]
  $region30: #{gcn_forward.7} parent=0
    _
  %s6 = ssub.s32 1, %s4
  %s7 = scalar_select 0, %s6, %s4
  // Predicated region
  $region2: #{gcn_forward.7} parent=0 // pred_check
    _
  $region3: #{gcn_forward.7} parent=0 // pred_check_branch
    %9 = sbr.rel (0) target = $region5
  $region4: #{gcn_forward.7} parent=0 // pred_region
    _
  $region5: #{gcn_forward.7} parent=0 // pred_fallthru
    _
  // Predicated region
  $region6: #{gcn_forward.7} parent=0 // pred_check
    _
  $region7: #{gcn_forward.7} parent=0 // pred_check_branch
    %11 = sbr.rel (0) target = $region9
  $region8: #{gcn_forward.7} parent=0 // pred_region
    _
  $region9: #{gcn_forward.7} parent=0 // pred_fallthru
    _
  // Predicated region
  $region10: #{gcn_forward.7} parent=0 // pred_check
    _
  $region11: #{gcn_forward.7} parent=0 // pred_check_branch
    %13 = sbr.rel (0) target = $region13
  $region12: #{gcn_forward.7} parent=0 // pred_region
    _
  $region13: #{gcn_forward.7} parent=0 // pred_fallthru
    _
  %p15 = scmp.eq.s32.totalorder 0, 0
  // Predicated region
  $region14: #{gcn_forward.7} parent=0 // pred_check
    %p16 = pneg %p15
  $region15: #{gcn_forward.7} parent=0 // pred_check_branch
    %18 = sbr.rel (%p16) target = $region17
  $region16: #{gcn_forward.7} parent=0 // pred_region
    %19 = vst [vmem:[#allocation2] sm:$0xff] 0.0
    %20 = vst [vmem:[#allocation2 + $0x8] sm:$0xff] 0.0
    %21 = vst [vmem:[#allocation2 + $0x10] sm:$0xff] 0.0
    %22 = vst [vmem:[#allocation2 + $0x18] sm:$0xff] 0.0
    %23 = vst [vmem:[#allocation2 + $0x20] sm:$0xff] 0.0
    %24 = vst [vmem:[#allocation2 + $0x28] sm:$0xff] 0.0
    %25 = vst [vmem:[#allocation2 + $0x30] sm:$0xff] 0.0
    %26 = vst [vmem:[#allocation2 + $0x38] sm:$0xff] 0.0
    %27 = vst [vmem:[#allocation2 + $0x40] sm:$0xff] 0.0
    %28 = vst [vmem:[#allocation2 + $0x48] sm:$0xff] 0.0
    %29 = vst [vmem:[#allocation2 + $0x50] sm:$0xff] 0.0
    %30 = vst [vmem:[#allocation2 + $0x58] sm:$0xff] 0.0
    %31 = vst [vmem:[#allocation2 + $0x60] sm:$0xff] 0.0
    %32 = vst [vmem:[#allocation2 + $0x68] sm:$0xff] 0.0
    %33 = vst [vmem:[#allocation2 + $0x70] sm:$0xff] 0.0
    %34 = vst [vmem:[#allocation2 + $0x78] sm:$0xff] 0.0
  $region17: #{gcn_forward.7} parent=0 // pred_fallthru
    _
  %v35 = vld [vmem:[#allocation2] sm:$0xff]
  %v36 = vld [vmem:[#allocation2 + $0x8] sm:$0xff]
  %v37 = vld [vmem:[#allocation2 + $0x10] sm:$0xff]
  %v38 = vld [vmem:[#allocation2 + $0x18] sm:$0xff]
  %v39 = vld [vmem:[#allocation2 + $0x20] sm:$0xff]
  %v40 = vld [vmem:[#allocation2 + $0x28] sm:$0xff]
  %v41 = vld [vmem:[#allocation2 + $0x30] sm:$0xff]
  %v42 = vld [vmem:[#allocation2 + $0x38] sm:$0xff]
  %v43 = vld [vmem:[#allocation2 + $0x40] sm:$0xff]
  %v44 = vld [vmem:[#allocation2 + $0x48] sm:$0xff]
  %v45 = vld [vmem:[#allocation2 + $0x50] sm:$0xff]
  %v46 = vld [vmem:[#allocation2 + $0x58] sm:$0xff]
  %v47 = vld [vmem:[#allocation2 + $0x60] sm:$0xff]
  %v48 = vld [vmem:[#allocation2 + $0x68] sm:$0xff]
  %v49 = vld [vmem:[#allocation2 + $0x70] sm:$0xff]
  %v50 = vld [vmem:[#allocation2 + $0x78] sm:$0xff]
  %v51 = vld [vmem:[%s0] sm:$0xf]
  %v52 = vld [vmem:[%s0 + $0x4] sm:$0xf]
  %v53 = vld [vmem:[%s0 + $0x8] sm:$0xf]
  %v54 = vld [vmem:[%s0 + $0xc] sm:$0xf]
  %v55 = vld [vmem:[%s0 + $0x10] sm:$0xf]
  %v56 = vld [vmem:[%s0 + $0x14] sm:$0xf]
  %v57 = vld [vmem:[%s0 + $0x18] sm:$0xf]
  %v58 = vld [vmem:[%s0 + $0x1c] sm:$0xf]
  %v59 = vld [vmem:[%s0 + $0x20] sm:$0xf]
  %v60 = vld [vmem:[%s0 + $0x24] sm:$0xf]
  %v61 = vld [vmem:[%s0 + $0x28] sm:$0xf]
  %v62 = vld [vmem:[%s0 + $0x2c] sm:$0xf]
  %v63 = vld [vmem:[%s0 + $0x30] sm:$0xf]
  %v64 = vld [vmem:[%s0 + $0x34] sm:$0xf]
  %v65 = vld [vmem:[%s0 + $0x38] sm:$0xf]
  %v66 = vld [vmem:[%s0 + $0x3c] sm:$0xf]
  %v67 = vld [vmem:[%s1] sm:$0xf]
  %v68 = vld [vmem:[%s1 + $0x4] sm:$0xf]
  %v69 = vld [vmem:[%s1 + $0x8] sm:$0xf]
  %v70 = vld [vmem:[%s1 + $0xc] sm:$0xf]
  %v71 = vld [vmem:[%s1 + $0x10] sm:$0xf]
  %v72 = vld [vmem:[%s1 + $0x14] sm:$0xf]
  %v73 = vld [vmem:[%s1 + $0x18] sm:$0xf]
  %v74 = vld [vmem:[%s1 + $0x1c] sm:$0xf]
  %v75 = vld [vmem:[%s1 + $0x20] sm:$0xf]
  %v76 = vld [vmem:[%s1 + $0x24] sm:$0xf]
  %v77 = vld [vmem:[%s1 + $0x28] sm:$0xf]
  %v78 = vld [vmem:[%s1 + $0x2c] sm:$0xf]
  %v79 = vld [vmem:[%s1 + $0x30] sm:$0xf]
  %v80 = vld [vmem:[%s1 + $0x34] sm:$0xf]
  %v81 = vld [vmem:[%s1 + $0x38] sm:$0xf]
  %v82 = vld [vmem:[%s1 + $0x3c] sm:$0xf]
  %v99 = vunpack.c.l.b16 %v51
  %v100 = vunpack.c.l.b16 %v52
  %v101 = vunpack.c.l.b16 %v53
  %v102 = vunpack.c.l.b16 %v54
  %v103 = vunpack.c.l.b16 %v55
  %v104 = vunpack.c.l.b16 %v56
  %v105 = vunpack.c.l.b16 %v57
  %v106 = vunpack.c.l.b16 %v58
  %v107 = vunpack.c.l.b16 %v59
  %v108 = vunpack.c.l.b16 %v60
  %v109 = vunpack.c.l.b16 %v61
  %v110 = vunpack.c.l.b16 %v62
  %v111 = vunpack.c.l.b16 %v63
  %v112 = vunpack.c.l.b16 %v64
  %v113 = vunpack.c.l.b16 %v65
  %v114 = vunpack.c.l.b16 %v66
  %v115 = vpack.c.b16 %v100, %v99
  %v116 = vpack.c.b16 %v102, %v101
  %v117 = vpack.c.b16 %v104, %v103
  %v118 = vpack.c.b16 %v106, %v105
  %v119 = vpack.c.b16 %v108, %v107
  %v120 = vpack.c.b16 %v110, %v109
  %v121 = vpack.c.b16 %v112, %v111
  %v122 = vpack.c.b16 %v114, %v113
  %v147 = vunpack.c.l.b16 %v67
  %v148 = vunpack.c.l.b16 %v68
  %v149 = vunpack.c.l.b16 %v69
  %v150 = vunpack.c.l.b16 %v70
  %v151 = vunpack.c.l.b16 %v71
  %v152 = vunpack.c.l.b16 %v72
  %v153 = vunpack.c.l.b16 %v73
  %v154 = vunpack.c.l.b16 %v74
  %v155 = vunpack.c.l.b16 %v75
  %v156 = vunpack.c.l.b16 %v76
  %v157 = vunpack.c.l.b16 %v77
  %v158 = vunpack.c.l.b16 %v78
  %v159 = vunpack.c.l.b16 %v79
  %v160 = vunpack.c.l.b16 %v80
  %v161 = vunpack.c.l.b16 %v81
  %v162 = vunpack.c.l.b16 %v82
  %v163 = vpack.c.b16 %v148, %v147
  %v164 = vpack.c.b16 %v150, %v149
  %v165 = vpack.c.b16 %v152, %v151
  %v166 = vpack.c.b16 %v154, %v153
  %v167 = vpack.c.b16 %v156, %v155
  %v168 = vpack.c.b16 %v158, %v157
  %v169 = vpack.c.b16 %v160, %v159
  %v170 = vpack.c.b16 %v162, %v161
  %179 = vmatprep.subr.bf16.mxu0 0
  %180 = vmatpush1.bf16.msra.mxu0 %v163
  %181 = vmatprep.subr.bf16.mxu0 0
  %182 = vmatpush1.bf16.msra.mxu0 %v164
  %183 = vmatprep.subr.bf16.mxu0 0
  %184 = vmatpush1.bf16.msra.mxu0 %v165
  %185 = vmatprep.subr.bf16.mxu0 0
  %186 = vmatpush1.bf16.msra.mxu0 %v166
  %187 = vmatprep.subr.bf16.mxu0 0
  %188 = vmatpush1.bf16.msra.mxu0 %v167
  %189 = vmatprep.subr.bf16.mxu0 0
  %190 = vmatpush1.bf16.msra.mxu0 %v168
  %191 = vmatprep.subr.bf16.mxu0 0
  %192 = vmatpush1.bf16.msra.mxu0 %v169
  %193 = vmatprep.subr.bf16.mxu0 0
  %194 = vmatpush1.bf16.msra.mxu0 %v170
  %195 = vmatprep.subr.bf16.mxu0 0
  %196 = vmatpush1.bf16.msra.mxu0 0
  %197 = vmatprep.subr.bf16.mxu0 0
  %198 = vmatpush1.bf16.msra.mxu0 0
  %199 = vmatprep.subr.bf16.mxu0 0
  %200 = vmatpush1.bf16.msra.mxu0 0
  %201 = vmatprep.subr.bf16.mxu0 0
  %202 = vmatpush1.bf16.msra.mxu0 0
  %203 = vmatprep.subr.bf16.mxu0 0
  %204 = vmatpush1.bf16.msra.mxu0 0
  %205 = vmatprep.subr.bf16.mxu0 0
  %206 = vmatpush1.bf16.msra.mxu0 0
  %207 = vmatprep.subr.bf16.mxu0 0
  %208 = vmatpush1.bf16.msra.mxu0 0
  %209 = vmatprep.subr.bf16.mxu0 0
  %210 = vmatpush1.bf16.msra.mxu0 0
  %211 = vmatprep.mubr.bf16.mxu0 0
  %212 = vmatmul.mubr.bf16.gmra.mrb[0].mxu0 %v115
  %v213 = vpop.f32.mrb[0].mxu0
  %v214 = vadd.f32 0.0, %v213
  %v215 = vpop.f32.mrb[0].mxu0
  %v216 = vpop.f32.mrb[0].mxu0
  %v217 = vadd.f32 0.0, %v216
  %v218 = vpop.f32.mrb[0].mxu0
  %219 = vmatprep.mubr.bf16.mxu0 0
  %220 = vmatmul.mubr.bf16.gmra.mrb[0].mxu0 %v116
  %v221 = vpop.f32.mrb[0].mxu0
  %v222 = vadd.f32 0.0, %v221
  %v223 = vpop.f32.mrb[0].mxu0
  %v224 = vpop.f32.mrb[0].mxu0
  %v225 = vadd.f32 0.0, %v224
  %v226 = vpop.f32.mrb[0].mxu0
  %227 = vmatprep.mubr.bf16.mxu0 0
  %228 = vmatmul.mubr.bf16.gmra.mrb[0].mxu0 %v117
  %v229 = vpop.f32.mrb[0].mxu0
  %v230 = vadd.f32 0.0, %v229
  %v231 = vpop.f32.mrb[0].mxu0
  %v232 = vpop.f32.mrb[0].mxu0
  %v233 = vadd.f32 0.0, %v232
  %v234 = vpop.f32.mrb[0].mxu0
  %235 = vmatprep.mubr.bf16.mxu0 0
  %236 = vmatmul.mubr.bf16.gmra.mrb[0].mxu0 %v118
  %v237 = vpop.f32.mrb[0].mxu0
  %v238 = vadd.f32 0.0, %v237
  %v239 = vpop.f32.mrb[0].mxu0
  %v240 = vpop.f32.mrb[0].mxu0
  %v241 = vadd.f32 0.0, %v240
  %v242 = vpop.f32.mrb[0].mxu0
  %243 = vmatprep.mubr.bf16.mxu0 0
  %244 = vmatmul.mubr.bf16.gmra.mrb[0].mxu0 %v119
  %v245 = vpop.f32.mrb[0].mxu0
  %v246 = vadd.f32 0.0, %v245
  %v247 = vpop.f32.mrb[0].mxu0
  %v248 = vpop.f32.mrb[0].mxu0
  %v249 = vadd.f32 0.0, %v248
  %v250 = vpop.f32.mrb[0].mxu0
  %251 = vmatprep.mubr.bf16.mxu0 0
  %252 = vmatmul.mubr.bf16.gmra.mrb[0].mxu0 %v120
  %v253 = vpop.f32.mrb[0].mxu0
  %v254 = vadd.f32 0.0, %v253
  %v255 = vpop.f32.mrb[0].mxu0
  %v256 = vpop.f32.mrb[0].mxu0
  %v257 = vadd.f32 0.0, %v256
  %v258 = vpop.f32.mrb[0].mxu0
  %259 = vmatprep.mubr.bf16.mxu0 0
  %260 = vmatmul.mubr.bf16.gmra.mrb[0].mxu0 %v121
  %v261 = vpop.f32.mrb[0].mxu0
  %v262 = vadd.f32 0.0, %v261
  %v263 = vpop.f32.mrb[0].mxu0
  %v264 = vpop.f32.mrb[0].mxu0
  %v265 = vadd.f32 0.0, %v264
  %v266 = vpop.f32.mrb[0].mxu0
  %267 = vmatprep.mubr.bf16.mxu0 0
  %268 = vmatmul.mubr.bf16.gmra.mrb[0].mxu0 %v122
  %v269 = vpop.f32.mrb[0].mxu0
  %v270 = vadd.f32 0.0, %v269
  %v271 = vpop.f32.mrb[0].mxu0
  %v272 = vpop.f32.mrb[0].mxu0
  %v273 = vadd.f32 0.0, %v272
  %v274 = vpop.f32.mrb[0].mxu0
  %275 = vdwg.mxu0
  %v276 = vadd.f32 %v35, %v214
  %v277 = vadd.f32 %v36, %v217
  %v278 = vadd.f32 %v37, %v222
  %v279 = vadd.f32 %v38, %v225
  %v280 = vadd.f32 %v39, %v230
  %v281 = vadd.f32 %v40, %v233
  %v282 = vadd.f32 %v41, %v238
  %v283 = vadd.f32 %v42, %v241
  %v284 = vadd.f32 %v43, %v246
  %v285 = vadd.f32 %v44, %v249
  %v286 = vadd.f32 %v45, %v254
  %v287 = vadd.f32 %v46, %v257
  %v288 = vadd.f32 %v47, %v262
  %v289 = vadd.f32 %v48, %v265
  %v290 = vadd.f32 %v49, %v270
  %v291 = vadd.f32 %v50, %v273
  %292 = vst [vmem:[#allocation2] sm:$0xff] %v276
  %293 = vst [vmem:[#allocation2 + $0x8] sm:$0xff] %v277
  %294 = vst [vmem:[#allocation2 + $0x10] sm:$0xff] %v278
  %295 = vst [vmem:[#allocation2 + $0x18] sm:$0xff] %v279
  %296 = vst [vmem:[#allocation2 + $0x20] sm:$0xff] %v280
  %297 = vst [vmem:[#allocation2 + $0x28] sm:$0xff] %v281
  %298 = vst [vmem:[#allocation2 + $0x30] sm:$0xff] %v282
  %299 = vst [vmem:[#allocation2 + $0x38] sm:$0xff] %v283
  %300 = vst [vmem:[#allocation2 + $0x40] sm:$0xff] %v284
  %301 = vst [vmem:[#allocation2 + $0x48] sm:$0xff] %v285
  %302 = vst [vmem:[#allocation2 + $0x50] sm:$0xff] %v286
  %303 = vst [vmem:[#allocation2 + $0x58] sm:$0xff] %v287
  %304 = vst [vmem:[#allocation2 + $0x60] sm:$0xff] %v288
  %305 = vst [vmem:[#allocation2 + $0x68] sm:$0xff] %v289
  %306 = vst [vmem:[#allocation2 + $0x70] sm:$0xff] %v290
  %307 = vst [vmem:[#allocation2 + $0x78] sm:$0xff] %v291
  // Predicated region
  $region18: #{gcn_forward.7} parent=0 // pred_check
    %p308 = pneg %p15
  $region19: #{gcn_forward.7} parent=0 // pred_check_branch
    %310 = sbr.rel (%p308) target = $region21
  $region20: #{gcn_forward.7} parent=0 // pred_region
    %v311 = vld [vmem:[#allocation2] sm:$0xff]
    %v312 = vld [vmem:[#allocation2 + $0x8] sm:$0xff]
    %v313 = vld [vmem:[#allocation2 + $0x10] sm:$0xff]
    %v314 = vld [vmem:[#allocation2 + $0x18] sm:$0xff]
    %v315 = vld [vmem:[#allocation2 + $0x20] sm:$0xff]
    %v316 = vld [vmem:[#allocation2 + $0x28] sm:$0xff]
    %v317 = vld [vmem:[#allocation2 + $0x30] sm:$0xff]
    %v318 = vld [vmem:[#allocation2 + $0x38] sm:$0xff]
    %v319 = vld [vmem:[#allocation2 + $0x40] sm:$0xff]
    %v320 = vld [vmem:[#allocation2 + $0x48] sm:$0xff]
    %v321 = vld [vmem:[#allocation2 + $0x50] sm:$0xff]
    %v322 = vld [vmem:[#allocation2 + $0x58] sm:$0xff]
    %v323 = vld [vmem:[#allocation2 + $0x60] sm:$0xff]
    %v324 = vld [vmem:[#allocation2 + $0x68] sm:$0xff]
    %v325 = vld [vmem:[#allocation2 + $0x70] sm:$0xff]
    %v326 = vld [vmem:[#allocation2 + $0x78] sm:$0xff]
    %v327 = vld [vmem:[%s2] sm:$0x1]
    %v329 = vlaneseq
    %v330 = vshrl.u32 %v329, 7
    %v331 = vsub.s32 0, %v330
    %v332 = vrot.slane %v327, %v331
    %v334 = vadd.f32 %v311, %v332
    %v335 = vadd.f32 %v312, %v332
    %v336 = vadd.f32 %v313, %v332
    %v337 = vadd.f32 %v314, %v332
    %v338 = vadd.f32 %v315, %v332
    %v339 = vadd.f32 %v316, %v332
    %v340 = vadd.f32 %v317, %v332
    %v341 = vadd.f32 %v318, %v332
    %v342 = vadd.f32 %v319, %v332
    %v343 = vadd.f32 %v320, %v332
    %v344 = vadd.f32 %v321, %v332
    %v345 = vadd.f32 %v322, %v332
    %v346 = vadd.f32 %v323, %v332
    %v347 = vadd.f32 %v324, %v332
    %v348 = vadd.f32 %v325, %v332
    %v349 = vadd.f32 %v326, %v332
    %350 = vst [vmem:[%s3] sm:$0xff] %v334
    %351 = vst [vmem:[%s3 + $0x8] sm:$0xff] %v335
    %352 = vst [vmem:[%s3 + $0x10] sm:$0xff] %v336
    %353 = vst [vmem:[%s3 + $0x18] sm:$0xff] %v337
    %354 = vst [vmem:[%s3 + $0x20] sm:$0xff] %v338
    %355 = vst [vmem:[%s3 + $0x28] sm:$0xff] %v339
    %356 = vst [vmem:[%s3 + $0x30] sm:$0xff] %v340
    %357 = vst [vmem:[%s3 + $0x38] sm:$0xff] %v341
    %358 = vst [vmem:[%s3 + $0x40] sm:$0xff] %v342
    %359 = vst [vmem:[%s3 + $0x48] sm:$0xff] %v343
    %360 = vst [vmem:[%s3 + $0x50] sm:$0xff] %v344
    %361 = vst [vmem:[%s3 + $0x58] sm:$0xff] %v345
    %362 = vst [vmem:[%s3 + $0x60] sm:$0xff] %v346
    %363 = vst [vmem:[%s3 + $0x68] sm:$0xff] %v347
    %364 = vst [vmem:[%s3 + $0x70] sm:$0xff] %v348
    %365 = vst [vmem:[%s3 + $0x78] sm:$0xff] %v349
  $region21: #{gcn_forward.7} parent=0 // pred_fallthru
    _
  // Predicated region
  $region22: #{gcn_forward.7} parent=0 // pred_check
    _
  $region23: #{gcn_forward.7} parent=0 // pred_check_branch
    %367 = sbr.rel (0) target = $region25
  $region24: #{gcn_forward.7} parent=0 // pred_region
    _
  $region25: #{gcn_forward.7} parent=0 // pred_fallthru
    _
  // Predicated region
  $region26: #{gcn_forward.7} parent=0 // pred_check
    _
  $region27: #{gcn_forward.7} parent=0 // pred_check_branch
    %369 = sbr.rel (0) target = $region29
  $region28: #{gcn_forward.7} parent=0 // pred_region
    _
  $region29: #{gcn_forward.7} parent=0 // pred_fallthru
    _

</llo_original>
